<compile_context>
chip_gen: v6e
topology: v6e:2x2x1
jax: 0.10.0
libtpu: 0.0.40
codegen_flags: <defaults>
</compile_context>

<pallas_src>
import jax
import jax.numpy as jnp
from jax.experimental import pallas as pl
from jax.experimental.pallas import tpu as pltpu

_VMEM_LIMIT = 48 * 1024 * 1024   # safe on v5e/v6e (128 MiB) and v7x (64 MiB)

_MAX_TM = 512
_MAX_TK = 1024
_MAX_TN = 256


# --------------------------------------------------------------------------
# Pallas kernels
# --------------------------------------------------------------------------
def _make_fused_kernel(relu: bool, with_res: bool):
    """Tiled matmul with f32 accumulator; epilogue: +bias [+res] [ReLU]."""
    def kernel(*refs):
        if with_res:
            a_ref, w_ref, b_ref, r_ref, o_ref, acc_ref = refs
        else:
            a_ref, w_ref, b_ref, o_ref, acc_ref = refs

        @pl.when(pl.program_id(2) == 0)
        def _init():
            acc_ref[...] = jnp.zeros_like(acc_ref)

        acc_ref[...] += jnp.dot(a_ref[...], w_ref[...],
                                preferred_element_type=jnp.float32)

        @pl.when(pl.program_id(2) == pl.num_programs(2) - 1)
        def _finalize():
            y = acc_ref[...] + b_ref[...]               # f32 epilogue
            if with_res:
                y = y + r_ref[...].astype(jnp.float32)
            if relu:
                y = jnp.maximum(y, 0.0)
            o_ref[...] = y.astype(o_ref.dtype)
    return kernel


def _head_kernel(x_ref, w_ref, b_ref, o_ref):
    # x_ref: (N, H*W, C); 1/(H*W) is already folded into w_ref, so pooling is
    # a plain sum (no VPU divide).
    pooled = jnp.sum(x_ref[...].astype(jnp.float32), axis=1)   # (N, C)
    o_ref[...] = jnp.dot(pooled, w_ref[...],
                         preferred_element_type=jnp.float32) + b_ref[...]


# --------------------------------------------------------------------------
# Tiling helpers + Pallas wrappers
# --------------------------------------------------------------------------
def _choose_tile(dim, max_tile, quantum):
    """Return (tile, padded_dim). Full-dim block if small, else a divisor that
    is a multiple of `quantum`; pad as a last resort."""
    if dim <= max_tile:
        return dim, dim
    t = (max_tile // quantum) * quantum
    while t >= quantum:
        if dim % t == 0:
            return t, dim
        t -= quantum
    t = (max_tile // quantum) * quantum
    return t, ((dim + t - 1) // t) * t


def fused_matmul_bias(a, w, bias, residual=None, relu=True):
    """a:(M,K) bf16 @ w:(K,N) bf16 + bias:(1,N) f32 [+ residual:(M,N)] [ReLU].

    Tiled over (M, N, K) with K innermost; f32 accumulator resident in VMEM.
    Output is bf16 (activations are kept bf16 end-to-end).
    """
    M, K = a.shape
    _, N = w.shape

    tm, Mp = _choose_tile(M, _MAX_TM, 8)
    tk, Kp = _choose_tile(K, _MAX_TK, 128)
    tn, Np = _choose_tile(N, _MAX_TN, 128)

    if Mp != M or Kp != K:
        a = jnp.pad(a, ((0, Mp - M), (0, Kp - K)))
    if Kp != K or Np != N:
        w = jnp.pad(w, ((0, Kp - K), (0, Np - N)))
    if Np != N:
        bias = jnp.pad(bias, ((0, 0), (0, Np - N)))
    with_res = residual is not None
    if with_res and (Mp != M or Np != N):
        residual = jnp.pad(residual, ((0, Mp - M), (0, Np - N)))

    grid = (Mp // tm, Np // tn, Kp // tk)

    in_specs = [
        pl.BlockSpec((tm, tk), lambda i, j, k: (i, k)),   # patches
        pl.BlockSpec((tk, tn), lambda i, j, k: (k, j)),   # folded weights
        pl.BlockSpec((1, tn), lambda i, j, k: (0, j)),    # folded BN bias
    ]
    inputs = [a, w, bias]
    if with_res:
        in_specs.append(pl.BlockSpec((tm, tn), lambda i, j, k: (i, j)))
        inputs.append(residual)

    out = pl.pallas_call(
        _make_fused_kernel(relu, with_res),
        out_shape=jax.ShapeDtypeStruct((Mp, Np), jnp.bfloat16),
        grid_spec=pltpu.PrefetchScalarGridSpec(
            num_scalar_prefetch=0,
            grid=grid,
            in_specs=in_specs,
            out_specs=pl.BlockSpec((tm, tn), lambda i, j, k: (i, j)),
            scratch_shapes=[pltpu.VMEM((tm, tn), jnp.float32)],
        ),
        compiler_params=pltpu.CompilerParams(
            dimension_semantics=("parallel", "parallel", "arbitrary"),
            vmem_limit_bytes=_VMEM_LIMIT,
        ),
    )(*inputs)

    if Mp != M or Np != N:
        out = out[:M, :N]
    return out


def head(x3, w, b):
    """x3:(N,HW,C) bf16 -> avgpool -> fc -> (N,num_classes) f32.

    1/(HW) is folded into w by the caller; output is a single tiny full block
    (num_classes < 128, so tiling it would only create masked stores).
    """
    N, HW, C = x3.shape
    nc = w.shape[1]
    return pl.pallas_call(
        _head_kernel,
        out_shape=jax.ShapeDtypeStruct((N, nc), jnp.float32),
        grid=(1,),
        in_specs=[pl.BlockSpec((N, HW, C), lambda i: (0, 0, 0)),
                  pl.BlockSpec((C, nc), lambda i: (0, 0)),
                  pl.BlockSpec((1, nc), lambda i: (0, 0))],
        out_specs=pl.BlockSpec((N, nc), lambda i: (0, 0)),
        compiler_params=pltpu.CompilerParams(vmem_limit_bytes=_VMEM_LIMIT),
    )(x3, w, b)


# --------------------------------------------------------------------------
# im2col glue (plain JAX) + conv helpers
# --------------------------------------------------------------------------
def im2col3x3(x, stride):
    """x: NHWC bf16, kernel 3x3, padding 1 -> (N, Ho, Wo, 9*C), (dy,dx,c)."""
    N, H, W, C = x.shape
    xp = jnp.pad(x, ((0, 0), (1, 1), (1, 1), (0, 0)))
    Ho = (H + 2 - 3) // stride + 1
    Wo = (W + 2 - 3) // stride + 1
    cols = []
    for dy in range(3):
        for dx in range(3):
            cols.append(xp[:, dy:dy + stride * Ho:stride,
                            dx:dx + stride * Wo:stride, :])
    return jnp.concatenate(cols, axis=-1)


def conv3x3_bn(x, p, stride, relu, residual=None):
    patches = im2col3x3(x, stride)
    N, Ho, Wo, KC = patches.shape
    p2 = patches.reshape(N * Ho * Wo, KC)
    r2 = None if residual is None else residual.reshape(N * Ho * Wo, -1)
    y = fused_matmul_bias(p2, p["w"], p["bias"], r2, relu)
    return y.reshape(N, Ho, Wo, -1)


def conv1x1_bn(x, p, stride):
    # TODO(synk): express the stride directly in the BlockSpec instead of a
    #             wrapper-level strided slice (extra activation copy in HBM).
    xs = x[:, ::stride, ::stride, :]
    N, Ho, Wo, C = xs.shape
    y = fused_matmul_bias(xs.reshape(N * Ho * Wo, C), p["w"], p["bias"],
                          None, relu=False)
    return y.reshape(N, Ho, Wo, -1)


def basic_block_forward(x, blk):
    identity = x
    out = conv3x3_bn(x, blk["conv1"], blk["stride"], relu=True)
    if "down" in blk:
        identity = conv1x1_bn(x, blk["down"], blk["stride"])
    # second conv: +bias, +identity, ReLU — all fused in the tiled epilogue
    out = conv3x3_bn(out, blk["conv2"], 1, relu=True, residual=identity)
    return out


# --------------------------------------------------------------------------
# Deterministic parameter init (BN folded: scale -> weights, bias separate)
# --------------------------------------------------------------------------
def init_conv_bn(key, cin, cout, ksize):
    kw, k1, k2, k3, k4 = jax.random.split(key, 5)
    fan_in = ksize * ksize * cin
    w = jax.random.normal(kw, (ksize * ksize * cin, cout), jnp.float32)
    w = w * (2.0 / fan_in) ** 0.5
    gamma = 1.0 + 0.1 * jax.random.normal(k1, (cout,), jnp.float32)
    beta = 0.1 * jax.random.normal(k2, (cout,), jnp.float32)
    mean = 0.1 * jax.random.normal(k3, (cout,), jnp.float32)
    var = jax.random.uniform(k4, (cout,), jnp.float32, 0.5, 1.5)
    scale = gamma / jnp.sqrt(var + 1e-5)
    bias = beta - mean * scale
    w_folded = (w * scale[None, :]).astype(jnp.bfloat16)   # fold BN scale
    return {"w": w_folded, "bias": bias.reshape(1, cout)}


def init_basic_block(key, cin, cout, stride):
    k1, k2, k3 = jax.random.split(key, 3)
    blk = {"conv1": init_conv_bn(k1, cin, cout, 3),
           "conv2": init_conv_bn(k2, cout, cout, 3),
           "stride": stride}
    if stride != 1 or cin != cout:
        blk["down"] = init_conv_bn(k3, cin, cout, 1)
    return blk


def init_resnet(key, layers, num_classes=10):
    keys = jax.random.split(key, 6)
    params = {"conv1": init_conv_bn(keys[0], 3, 64, 3)}
    inplanes = 64
    stages = []
    stage_planes = [64, 128, 256, 512]
    stage_strides = [1, 2, 2, 2]
    for si, (planes, s0, nblocks) in enumerate(
            zip(stage_planes, stage_strides, layers)):
        bkeys = jax.random.split(keys[1 + si], nblocks)
        stage = [init_basic_block(bkeys[0], inplanes, planes, s0)]
        inplanes = planes
        for bi in range(1, nblocks):
            stage.append(init_basic_block(bkeys[bi], inplanes, planes, 1))
        stages.append(stage)
    params["stages"] = stages
    kfw, kfb = jax.random.split(keys[5])
    params["fc_w"] = jax.random.normal(kfw, (512, num_classes), jnp.float32) \
        * (1.0 / 512.0) ** 0.5
    params["fc_b"] = 0.01 * jax.random.normal(kfb, (1, num_classes), jnp.float32)
    return params


# --------------------------------------------------------------------------
# Full forward pass
# --------------------------------------------------------------------------
def resnet_forward(params, x_nchw):
    # NCHW -> NHWC, activations carried in bf16 (f32 accumulate in-kernel)
    x = jnp.transpose(x_nchw, (0, 2, 3, 1)).astype(jnp.bfloat16)
    x = conv3x3_bn(x, params["conv1"], stride=1, relu=True)     # conv1+BN+ReLU
    for stage in params["stages"]:
        for blk in stage:
            x = basic_block_forward(x, blk)
    N, H, W, C = x.shape
    x3 = x.reshape(N, H * W, C)
    fc_w = params["fc_w"] * (1.0 / (H * W))                     # fold 1/HW
    return head(x3, fc_w, params["fc_b"])                       # avgpool + fc


if __name__ == "__main__":
    key = jax.random.PRNGKey(0)
    kparam, kx = jax.random.split(key)

    # ResNet with BasicBlock, layers=[1, 1, 1, 1], num_classes=10
    params = init_resnet(kparam, layers=[1, 1, 1, 1], num_classes=10)

    # Small input consistent with the module: NCHW, 3 input channels
    x = jax.random.normal(kx, (2, 3, 16, 16), jnp.float32)

    logits = resnet_forward(params, x)
    logits = jax.block_until_ready(logits)
    assert logits.shape == (2, 10), logits.shape
    print("KERNEL_OK")
</pallas_src>

<mosaic_0001>
module attributes {stable_mosaic.version = 11 : i64} {
  func.func @kernel(%arg0: i32, %arg1: i32, %arg2: i32, %arg3: memref<512x27xbf16, #tpu.memory_space<vmem>>, %arg4: memref<27x64xbf16, #tpu.memory_space<vmem>>, %arg5: memref<1x64xf32, #tpu.memory_space<vmem>>, %arg6: memref<512x64xbf16, #tpu.memory_space<vmem>>, %arg7: memref<512x64xf32, #tpu.memory_space<vmem>>) attributes {dimension_semantics = [#tpu.dimension_semantics<parallel>, #tpu.dimension_semantics<parallel>, #tpu.dimension_semantics<arbitrary>], iteration_bounds = array<i64: 1, 1, 1>, scalar_prefetch = 0 : i64, scratch_operands = 1 : i64, tpu.core_type = #tpu.core_type<tc>, window_params = [{transform_indices = @transform_0, window_bounds = array<i64: 512, 27>}, {transform_indices = @transform_1, window_bounds = array<i64: 27, 64>}, {transform_indices = @transform_2, window_bounds = array<i64: 1, 64>}, {transform_indices = @transform_3, window_bounds = array<i64: 512, 64>}]} {
    %c0_i32 = arith.constant 0 : i32
    %0 = arith.cmpi eq, %arg2, %c0_i32 : i32
    %1 = arith.extui %0 : i1 to i32
    %c0_i32_0 = arith.constant 0 : i32
    %2 = arith.cmpi ne, %1, %c0_i32_0 : i32
    scf.if %2 {
      %cst_10 = arith.constant 0.000000e+00 : f32
      %12 = vector.broadcast %cst_10 : f32 to vector<512x64xf32>
      %c0_11 = arith.constant 0 : index
      %c0_12 = arith.constant 0 : index
      %13 = vector.load %arg7[%c0_11, %c0_12] : memref<512x64xf32, #tpu.memory_space<vmem>>, vector<512x64xf32>
      tpu.vector_store %arg7[%c0_11, %c0_12], %12 {strides = array<i32>} : memref<512x64xf32, #tpu.memory_space<vmem>>, vector<512x64xf32>,
    } else {
    }
    %c0 = arith.constant 0 : index
    %c0_1 = arith.constant 0 : index
    %3 = vector.load %arg7[%c0, %c0_1] : memref<512x64xf32, #tpu.memory_space<vmem>>, vector<512x64xf32>
    %c0_2 = arith.constant 0 : index
    %c0_3 = arith.constant 0 : index
    %4 = vector.load %arg3[%c0_2, %c0_3] : memref<512x27xbf16, #tpu.memory_space<vmem>>, vector<512x27xbf16>
    %c0_4 = arith.constant 0 : index
    %c0_5 = arith.constant 0 : index
    %5 = vector.load %arg4[%c0_4, %c0_5] : memref<27x64xbf16, #tpu.memory_space<vmem>>, vector<27x64xbf16>
    %cst = arith.constant dense<0.000000e+00> : vector<512x64xf32>
    %6 = tpu.matmul %4, %5, %cst {dimension_numbers = #tpu.dot_dimension_numbers<[1], [0], [0], [1], [0, 0, 1, 1], [], []>} : vector<512x27xbf16>, vector<27x64xbf16>, vector<512x64xf32> -> vector<512x64xf32>
    %7 = arith.addf %3, %6 : vector<512x64xf32>
    %c0_6 = arith.constant 0 : index
    %c0_7 = arith.constant 0 : index
    %8 = vector.load %arg7[%c0_6, %c0_7] : memref<512x64xf32, #tpu.memory_space<vmem>>, vector<512x64xf32>
    tpu.vector_store %arg7[%c0_6, %c0_7], %7 {strides = array<i32>} : memref<512x64xf32, #tpu.memory_space<vmem>>, vector<512x64xf32>,
    %c0_i32_8 = arith.constant 0 : i32
    %9 = arith.cmpi eq, %arg2, %c0_i32_8 : i32
    %10 = arith.extui %9 : i1 to i32
    %c0_i32_9 = arith.constant 0 : i32
    %11 = arith.cmpi ne, %10, %c0_i32_9 : i32
    scf.if %11 {
      %c0_10 = arith.constant 0 : index
      %c0_11 = arith.constant 0 : index
      %12 = vector.load %arg7[%c0_10, %c0_11] : memref<512x64xf32, #tpu.memory_space<vmem>>, vector<512x64xf32>
      %c0_12 = arith.constant 0 : index
      %c0_13 = arith.constant 0 : index
      %13 = vector.load %arg5[%c0_12, %c0_13] : memref<1x64xf32, #tpu.memory_space<vmem>>, vector<1x64xf32>
      %14 = vector.broadcast %13 : vector<1x64xf32> to vector<512x64xf32>
      %15 = arith.addf %12, %14 : vector<512x64xf32>
      %cst_14 = arith.constant 0.000000e+00 : f32
      %16 = vector.broadcast %cst_14 : f32 to vector<512x64xf32>
      %17 = arith.maximumf %15, %16 : vector<512x64xf32>
      %18 = arith.truncf %17 : vector<512x64xf32> to vector<512x64xbf16>
      %c0_15 = arith.constant 0 : index
      %c0_16 = arith.constant 0 : index
      %19 = vector.load %arg6[%c0_15, %c0_16] : memref<512x64xbf16, #tpu.memory_space<vmem>>, vector<512x64xbf16>
      tpu.vector_store %arg6[%c0_15, %c0_16], %18 {strides = array<i32>} : memref<512x64xbf16, #tpu.memory_space<vmem>>, vector<512x64xbf16>,
    } else {
    }
    return
  }
  func.func @transform_0(%arg0: i32, %arg1: i32, %arg2: i32) -> (i32, i32) {
    %c0_i32 = arith.constant 0 : i32
    return %arg0, %arg2 : i32, i32
  }
  func.func @transform_1(%arg0: i32, %arg1: i32, %arg2: i32) -> (i32, i32) {
    %c0_i32 = arith.constant 0 : i32
    return %arg2, %arg1 : i32, i32
  }
  func.func @transform_2(%arg0: i32, %arg1: i32, %arg2: i32) -> (i32, i32) {
    %c0_i32 = arith.constant 0 : i32
    %c0_i32_0 = arith.constant 0 : i32
    return %c0_i32, %arg1 : i32, i32
  }
  func.func @transform_3(%arg0: i32, %arg1: i32, %arg2: i32) -> (i32, i32) {
    %c0_i32 = arith.constant 0 : i32
    return %arg0, %arg1 : i32, i32
  }
}

</mosaic_0001>

<llo_original>
// kernel: tpu_custom_call.1
$region0: #{tpu_custom_call.1}
  #allocation0 [shape = 'u32[]', space=smem, size = 0x4, offset = 0x4, fixed_abs, tag = 'smem constant byte address 0x4 - core index']
  #allocation1 [shape = 'u32[144,128]{1,0:T(1,128)}', space=vmem, size = 0x12000, scoped, tag = 'internal scratch']
  #allocation2 [shape = 'f32[512,64]{1,0:T(8,128)}', space=vmem, size = 0x40000, scoped, tag = 'scratch operand']
  %s0 = inlined_call_operand.vmem [shape: bf16[512,27], index: 0, kind: input, shape index: {}]
  %s1 = inlined_call_operand.vmem [shape: bf16[27,64], index: 1, kind: input, shape index: {}]
  %s2 = inlined_call_operand.vmem [shape: f32[1,64], index: 2, kind: input, shape index: {}]
  %s3 = inlined_call_operand.vmem [shape: bf16[512,64], index: 3, kind: output, shape index: {}]
  %s4 = sld [smem:[#allocation0]]
  $region30: #{tpu_custom_call.1} parent=0
    _
  %s6 = ssub.s32 1, %s4
  %s7 = scalar_select 0, %s6, %s4
  // Predicated region
  $region2: #{tpu_custom_call.1} parent=0 // pred_check
    _
  $region3: #{tpu_custom_call.1} parent=0 // pred_check_branch
    %9 = sbr.rel (0) target = $region5
  $region4: #{tpu_custom_call.1} parent=0 // pred_region
    _
  $region5: #{tpu_custom_call.1} parent=0 // pred_fallthru
    _
  // Predicated region
  $region6: #{tpu_custom_call.1} parent=0 // pred_check
    _
  $region7: #{tpu_custom_call.1} parent=0 // pred_check_branch
    %11 = sbr.rel (0) target = $region9
  $region8: #{tpu_custom_call.1} parent=0 // pred_region
    _
  $region9: #{tpu_custom_call.1} parent=0 // pred_fallthru
    _
  // Predicated region
  $region10: #{tpu_custom_call.1} parent=0 // pred_check
    _
  $region11: #{tpu_custom_call.1} parent=0 // pred_check_branch
    %13 = sbr.rel (0) target = $region13
  $region12: #{tpu_custom_call.1} parent=0 // pred_region
    _
  $region13: #{tpu_custom_call.1} parent=0 // pred_fallthru
    _
  %p15 = scmp.eq.s32.totalorder 0, 0
  // Predicated region
  $region14: #{tpu_custom_call.1} parent=0 // pred_check
    %p16 = pneg %p15
  $region15: #{tpu_custom_call.1} parent=0 // pred_check_branch
    %18 = sbr.rel (%p16) target = $region17
  $region16: #{tpu_custom_call.1} parent=0 // pred_region
    %vm19 = vcmask 523264
    %20 = vst.msk [vmem:[#allocation2] sm:$0xff] %vm19, 0.0
    %21 = vst.msk [vmem:[#allocation2 + $0x8] sm:$0xff] %vm19, 0.0
    %22 = vst.msk [vmem:[#allocation2 + $0x10] sm:$0xff] %vm19, 0.0
    %23 = vst.msk [vmem:[#allocation2 + $0x18] sm:$0xff] %vm19, 0.0
    %24 = vst.msk [vmem:[#allocation2 + $0x20] sm:$0xff] %vm19, 0.0
    %25 = vst.msk [vmem:[#allocation2 + $0x28] sm:$0xff] %vm19, 0.0
    %26 = vst.msk [vmem:[#allocation2 + $0x30] sm:$0xff] %vm19, 0.0
    %27 = vst.msk [vmem:[#allocation2 + $0x38] sm:$0xff] %vm19, 0.0
    %28 = vst.msk [vmem:[#allocation2 + $0x40] sm:$0xff] %vm19, 0.0
    %29 = vst.msk [vmem:[#allocation2 + $0x48] sm:$0xff] %vm19, 0.0
    %30 = vst.msk [vmem:[#allocation2 + $0x50] sm:$0xff] %vm19, 0.0
    %31 = vst.msk [vmem:[#allocation2 + $0x58] sm:$0xff] %vm19, 0.0
    %32 = vst.msk [vmem:[#allocation2 + $0x60] sm:$0xff] %vm19, 0.0
    %33 = vst.msk [vmem:[#allocation2 + $0x68] sm:$0xff] %vm19, 0.0
    %34 = vst.msk [vmem:[#allocation2 + $0x70] sm:$0xff] %vm19, 0.0
    %35 = vst.msk [vmem:[#allocation2 + $0x78] sm:$0xff] %vm19, 0.0
    %36 = vst.msk [vmem:[#allocation2 + $0x80] sm:$0xff] %vm19, 0.0
    %37 = vst.msk [vmem:[#allocation2 + $0x88] sm:$0xff] %vm19, 0.0
    %38 = vst.msk [vmem:[#allocation2 + $0x90] sm:$0xff] %vm19, 0.0
    %39 = vst.msk [vmem:[#allocation2 + $0x98] sm:$0xff] %vm19, 0.0
    %40 = vst.msk [vmem:[#allocation2 + $0xa0] sm:$0xff] %vm19, 0.0
    %41 = vst.msk [vmem:[#allocation2 + $0xa8] sm:$0xff] %vm19, 0.0
    %42 = vst.msk [vmem:[#allocation2 + $0xb0] sm:$0xff] %vm19, 0.0
    %43 = vst.msk [vmem:[#allocation2 + $0xb8] sm:$0xff] %vm19, 0.0
    %44 = vst.msk [vmem:[#allocation2 + $0xc0] sm:$0xff] %vm19, 0.0
    %45 = vst.msk [vmem:[#allocation2 + $0xc8] sm:$0xff] %vm19, 0.0
    %46 = vst.msk [vmem:[#allocation2 + $0xd0] sm:$0xff] %vm19, 0.0
    %47 = vst.msk [vmem:[#allocation2 + $0xd8] sm:$0xff] %vm19, 0.0
    %48 = vst.msk [vmem:[#allocation2 + $0xe0] sm:$0xff] %vm19, 0.0
    %49 = vst.msk [vmem:[#allocation2 + $0xe8] sm:$0xff] %vm19, 0.0
    %50 = vst.msk [vmem:[#allocation2 + $0xf0] sm:$0xff] %vm19, 0.0
    %51 = vst.msk [vmem:[#allocation2 + $0xf8] sm:$0xff] %vm19, 0.0
    %52 = vst.msk [vmem:[#allocation2 + $0x100] sm:$0xff] %vm19, 0.0
    %53 = vst.msk [vmem:[#allocation2 + $0x108] sm:$0xff] %vm19, 0.0
    %54 = vst.msk [vmem:[#allocation2 + $0x110] sm:$0xff] %vm19, 0.0
    %55 = vst.msk [vmem:[#allocation2 + $0x118] sm:$0xff] %vm19, 0.0
    %56 = vst.msk [vmem:[#allocation2 + $0x120] sm:$0xff] %vm19, 0.0
    %57 = vst.msk [vmem:[#allocation2 + $0x128] sm:$0xff] %vm19, 0.0
    %58 = vst.msk [vmem:[#allocation2 + $0x130] sm:$0xff] %vm19, 0.0
    %59 = vst.msk [vmem:[#allocation2 + $0x138] sm:$0xff] %vm19, 0.0
    %60 = vst.msk [vmem:[#allocation2 + $0x140] sm:$0xff] %vm19, 0.0
    %61 = vst.msk [vmem:[#allocation2 + $0x148] sm:$0xff] %vm19, 0.0
    %62 = vst.msk [vmem:[#allocation2 + $0x150] sm:$0xff] %vm19, 0.0
    %63 = vst.msk [vmem:[#allocation2 + $0x158] sm:$0xff] %vm19, 0.0
    %64 = vst.msk [vmem:[#allocation2 + $0x160] sm:$0xff] %vm19, 0.0
    %65 = vst.msk [vmem:[#allocation2 + $0x168] sm:$0xff] %vm19, 0.0
    %66 = vst.msk [vmem:[#allocation2 + $0x170] sm:$0xff] %vm19, 0.0
    %67 = vst.msk [vmem:[#allocation2 + $0x178] sm:$0xff] %vm19, 0.0
    %68 = vst.msk [vmem:[#allocation2 + $0x180] sm:$0xff] %vm19, 0.0
    %69 = vst.msk [vmem:[#allocation2 + $0x188] sm:$0xff] %vm19, 0.0
    %70 = vst.msk [vmem:[#allocation2 + $0x190] sm:$0xff] %vm19, 0.0
    %71 = vst.msk [vmem:[#allocation2 + $0x198] sm:$0xff] %vm19, 0.0
    %72 = vst.msk [vmem:[#allocation2 + $0x1a0] sm:$0xff] %vm19, 0.0
    %73 = vst.msk [vmem:[#allocation2 + $0x1a8] sm:$0xff] %vm19, 0.0
    %74 = vst.msk [vmem:[#allocation2 + $0x1b0] sm:$0xff] %vm19, 0.0
    %75 = vst.msk [vmem:[#allocation2 + $0x1b8] sm:$0xff] %vm19, 0.0
    %76 = vst.msk [vmem:[#allocation2 + $0x1c0] sm:$0xff] %vm19, 0.0
    %77 = vst.msk [vmem:[#allocation2 + $0x1c8] sm:$0xff] %vm19, 0.0
    %78 = vst.msk [vmem:[#allocation2 + $0x1d0] sm:$0xff] %vm19, 0.0
    %79 = vst.msk [vmem:[#allocation2 + $0x1d8] sm:$0xff] %vm19, 0.0
    %80 = vst.msk [vmem:[#allocation2 + $0x1e0] sm:$0xff] %vm19, 0.0
    %81 = vst.msk [vmem:[#allocation2 + $0x1e8] sm:$0xff] %vm19, 0.0
    %82 = vst.msk [vmem:[#allocation2 + $0x1f0] sm:$0xff] %vm19, 0.0
    %83 = vst.msk [vmem:[#allocation2 + $0x1f8] sm:$0xff] %vm19, 0.0
  $region17: #{tpu_custom_call.1} parent=0 // pred_fallthru
    _
  %v84 = vld [vmem:[#allocation2] sm:$0xff]
  %v85 = vld [vmem:[#allocation2 + $0x8] sm:$0xff]
  %v86 = vld [vmem:[#allocation2 + $0x10] sm:$0xff]
  %v87 = vld [vmem:[#allocation2 + $0x18] sm:$0xff]
  %v88 = vld [vmem:[#allocation2 + $0x20] sm:$0xff]
  %v89 = vld [vmem:[#allocation2 + $0x28] sm:$0xff]
  %v90 = vld [vmem:[#allocation2 + $0x30] sm:$0xff]
  %v91 = vld [vmem:[#allocation2 + $0x38] sm:$0xff]
  %v92 = vld [vmem:[#allocation2 + $0x40] sm:$0xff]
  %v93 = vld [vmem:[#allocation2 + $0x48] sm:$0xff]
  %v94 = vld [vmem:[#allocation2 + $0x50] sm:$0xff]
  %v95 = vld [vmem:[#allocation2 + $0x58] sm:$0xff]
  %v96 = vld [vmem:[#allocation2 + $0x60] sm:$0xff]
  %v97 = vld [vmem:[#allocation2 + $0x68] sm:$0xff]
  %v98 = vld [vmem:[#allocation2 + $0x70] sm:$0xff]
  %v99 = vld [vmem:[#allocation2 + $0x78] sm:$0xff]
  %v100 = vld [vmem:[#allocation2 + $0x80] sm:$0xff]
  %v101 = vld [vmem:[#allocation2 + $0x88] sm:$0xff]
  %v102 = vld [vmem:[#allocation2 + $0x90] sm:$0xff]
  %v103 = vld [vmem:[#allocation2 + $0x98] sm:$0xff]
  %v104 = vld [vmem:[#allocation2 + $0xa0] sm:$0xff]
  %v105 = vld [vmem:[#allocation2 + $0xa8] sm:$0xff]
  %v106 = vld [vmem:[#allocation2 + $0xb0] sm:$0xff]
  %v107 = vld [vmem:[#allocation2 + $0xb8] sm:$0xff]
  %v108 = vld [vmem:[#allocation2 + $0xc0] sm:$0xff]
  %v109 = vld [vmem:[#allocation2 + $0xc8] sm:$0xff]
  %v110 = vld [vmem:[#allocation2 + $0xd0] sm:$0xff]
  %v111 = vld [vmem:[#allocation2 + $0xd8] sm:$0xff]
  %v112 = vld [vmem:[#allocation2 + $0xe0] sm:$0xff]
  %v113 = vld [vmem:[#allocation2 + $0xe8] sm:$0xff]
  %v114 = vld [vmem:[#allocation2 + $0xf0] sm:$0xff]
  %v115 = vld [vmem:[#allocation2 + $0xf8] sm:$0xff]
  %v116 = vld [vmem:[#allocation2 + $0x100] sm:$0xff]
  %v117 = vld [vmem:[#allocation2 + $0x108] sm:$0xff]
  %v118 = vld [vmem:[#allocation2 + $0x110] sm:$0xff]
  %v119 = vld [vmem:[#allocation2 + $0x118] sm:$0xff]
  %v120 = vld [vmem:[#allocation2 + $0x120] sm:$0xff]
  %v121 = vld [vmem:[#allocation2 + $0x128] sm:$0xff]
  %v122 = vld [vmem:[#allocation2 + $0x130] sm:$0xff]
  %v123 = vld [vmem:[#allocation2 + $0x138] sm:$0xff]
  %v124 = vld [vmem:[#allocation2 + $0x140] sm:$0xff]
  %v125 = vld [vmem:[#allocation2 + $0x148] sm:$0xff]
  %v126 = vld [vmem:[#allocation2 + $0x150] sm:$0xff]
  %v127 = vld [vmem:[#allocation2 + $0x158] sm:$0xff]
  %v128 = vld [vmem:[#allocation2 + $0x160] sm:$0xff]
  %v129 = vld [vmem:[#allocation2 + $0x168] sm:$0xff]
  %v130 = vld [vmem:[#allocation2 + $0x170] sm:$0xff]
  %v131 = vld [vmem:[#allocation2 + $0x178] sm:$0xff]
  %v132 = vld [vmem:[#allocation2 + $0x180] sm:$0xff]
  %v133 = vld [vmem:[#allocation2 + $0x188] sm:$0xff]
  %v134 = vld [vmem:[#allocation2 + $0x190] sm:$0xff]
  %v135 = vld [vmem:[#allocation2 + $0x198] sm:$0xff]
  %v136 = vld [vmem:[#allocation2 + $0x1a0] sm:$0xff]
  %v137 = vld [vmem:[#allocation2 + $0x1a8] sm:$0xff]
  %v138 = vld [vmem:[#allocation2 + $0x1b0] sm:$0xff]
  %v139 = vld [vmem:[#allocation2 + $0x1b8] sm:$0xff]
  %v140 = vld [vmem:[#allocation2 + $0x1c0] sm:$0xff]
  %v141 = vld [vmem:[#allocation2 + $0x1c8] sm:$0xff]
  %v142 = vld [vmem:[#allocation2 + $0x1d0] sm:$0xff]
  %v143 = vld [vmem:[#allocation2 + $0x1d8] sm:$0xff]
  %v144 = vld [vmem:[#allocation2 + $0x1e0] sm:$0xff]
  %v145 = vld [vmem:[#allocation2 + $0x1e8] sm:$0xff]
  %v146 = vld [vmem:[#allocation2 + $0x1f0] sm:$0xff]
  %v147 = vld [vmem:[#allocation2 + $0x1f8] sm:$0xff]
  %v148 = vld [vmem:[%s0] sm:$0xf]
  %v149 = vld [vmem:[%s0 + $0x4] sm:$0xf]
  %v150 = vld [vmem:[%s0 + $0x8] sm:$0xf]
  %v151 = vld [vmem:[%s0 + $0xc] sm:$0xf]
  %v152 = vld [vmem:[%s0 + $0x10] sm:$0xf]
  %v153 = vld [vmem:[%s0 + $0x14] sm:$0xf]
  %v154 = vld [vmem:[%s0 + $0x18] sm:$0xf]
  %v155 = vld [vmem:[%s0 + $0x1c] sm:$0xf]
  %v156 = vld [vmem:[%s0 + $0x20] sm:$0xf]
  %v157 = vld [vmem:[%s0 + $0x24] sm:$0xf]
  %v158 = vld [vmem:[%s0 + $0x28] sm:$0xf]
  %v159 = vld [vmem:[%s0 + $0x2c] sm:$0xf]
  %v160 = vld [vmem:[%s0 + $0x30] sm:$0xf]
  %v161 = vld [vmem:[%s0 + $0x34] sm:$0xf]
  %v162 = vld [vmem:[%s0 + $0x38] sm:$0xf]
  %v163 = vld [vmem:[%s0 + $0x3c] sm:$0xf]
  %v164 = vld [vmem:[%s0 + $0x40] sm:$0xf]
  %v165 = vld [vmem:[%s0 + $0x44] sm:$0xf]
  %v166 = vld [vmem:[%s0 + $0x48] sm:$0xf]
  %v167 = vld [vmem:[%s0 + $0x4c] sm:$0xf]
  %v168 = vld [vmem:[%s0 + $0x50] sm:$0xf]
  %v169 = vld [vmem:[%s0 + $0x54] sm:$0xf]
  %v170 = vld [vmem:[%s0 + $0x58] sm:$0xf]
  %v171 = vld [vmem:[%s0 + $0x5c] sm:$0xf]
  %v172 = vld [vmem:[%s0 + $0x60] sm:$0xf]
  %v173 = vld [vmem:[%s0 + $0x64] sm:$0xf]
  %v174 = vld [vmem:[%s0 + $0x68] sm:$0xf]
  %v175 = vld [vmem:[%s0 + $0x6c] sm:$0xf]
  %v176 = vld [vmem:[%s0 + $0x70] sm:$0xf]
  %v177 = vld [vmem:[%s0 + $0x74] sm:$0xf]
  %v178 = vld [vmem:[%s0 + $0x78] sm:$0xf]
  %v179 = vld [vmem:[%s0 + $0x7c] sm:$0xf]
  %v180 = vld [vmem:[%s0 + $0x80] sm:$0xf]
  %v181 = vld [vmem:[%s0 + $0x84] sm:$0xf]
  %v182 = vld [vmem:[%s0 + $0x88] sm:$0xf]
  %v183 = vld [vmem:[%s0 + $0x8c] sm:$0xf]
  %v184 = vld [vmem:[%s0 + $0x90] sm:$0xf]
  %v185 = vld [vmem:[%s0 + $0x94] sm:$0xf]
  %v186 = vld [vmem:[%s0 + $0x98] sm:$0xf]
  %v187 = vld [vmem:[%s0 + $0x9c] sm:$0xf]
  %v188 = vld [vmem:[%s0 + $0xa0] sm:$0xf]
  %v189 = vld [vmem:[%s0 + $0xa4] sm:$0xf]
  %v190 = vld [vmem:[%s0 + $0xa8] sm:$0xf]
  %v191 = vld [vmem:[%s0 + $0xac] sm:$0xf]
  %v192 = vld [vmem:[%s0 + $0xb0] sm:$0xf]
  %v193 = vld [vmem:[%s0 + $0xb4] sm:$0xf]
  %v194 = vld [vmem:[%s0 + $0xb8] sm:$0xf]
  %v195 = vld [vmem:[%s0 + $0xbc] sm:$0xf]
  %v196 = vld [vmem:[%s0 + $0xc0] sm:$0xf]
  %v197 = vld [vmem:[%s0 + $0xc4] sm:$0xf]
  %v198 = vld [vmem:[%s0 + $0xc8] sm:$0xf]
  %v199 = vld [vmem:[%s0 + $0xcc] sm:$0xf]
  %v200 = vld [vmem:[%s0 + $0xd0] sm:$0xf]
  %v201 = vld [vmem:[%s0 + $0xd4] sm:$0xf]
  %v202 = vld [vmem:[%s0 + $0xd8] sm:$0xf]
  %v203 = vld [vmem:[%s0 + $0xdc] sm:$0xf]
  %v204 = vld [vmem:[%s0 + $0xe0] sm:$0xf]
  %v205 = vld [vmem:[%s0 + $0xe4] sm:$0xf]
  %v206 = vld [vmem:[%s0 + $0xe8] sm:$0xf]
  %v207 = vld [vmem:[%s0 + $0xec] sm:$0xf]
  %v208 = vld [vmem:[%s0 + $0xf0] sm:$0xf]
  %v209 = vld [vmem:[%s0 + $0xf4] sm:$0xf]
  %v210 = vld [vmem:[%s0 + $0xf8] sm:$0xf]
  %v211 = vld [vmem:[%s0 + $0xfc] sm:$0xf]
  %v212 = vld [vmem:[%s1] sm:$0xf]
  %v213 = vld [vmem:[%s1 + $0x4] sm:$0xf]
  %v214 = vld [vmem:[%s1 + $0x8] sm:$0xf]
  %v215 = vld [vmem:[%s1 + $0xc] sm:$0x3]
  %v280 = vunpack.c.l.b16 %v148
  %v281 = vunpack.c.l.b16 %v149
  %v282 = vunpack.c.l.b16 %v150
  %v283 = vunpack.c.l.b16 %v151
  %v284 = vunpack.c.l.b16 %v152
  %v285 = vunpack.c.l.b16 %v153
  %v286 = vunpack.c.l.b16 %v154
  %v287 = vunpack.c.l.b16 %v155
  %v288 = vunpack.c.l.b16 %v156
  %v289 = vunpack.c.l.b16 %v157
  %v290 = vunpack.c.l.b16 %v158
  %v291 = vunpack.c.l.b16 %v159
  %v292 = vunpack.c.l.b16 %v160
  %v293 = vunpack.c.l.b16 %v161
  %v294 = vunpack.c.l.b16 %v162
  %v295 = vunpack.c.l.b16 %v163
  %v296 = vunpack.c.l.b16 %v164
  %v297 = vunpack.c.l.b16 %v165
  %v298 = vunpack.c.l.b16 %v166
  %v299 = vunpack.c.l.b16 %v167
  %v300 = vunpack.c.l.b16 %v168
  %v301 = vunpack.c.l.b16 %v169
  %v302 = vunpack.c.l.b16 %v170
  %v303 = vunpack.c.l.b16 %v171
  %v304 = vunpack.c.l.b16 %v172
  %v305 = vunpack.c.l.b16 %v173
  %v306 = vunpack.c.l.b16 %v174
  %v307 = vunpack.c.l.b16 %v175
  %v308 = vunpack.c.l.b16 %v176
  %v309 = vunpack.c.l.b16 %v177
  %v310 = vunpack.c.l.b16 %v178
  %v311 = vunpack.c.l.b16 %v179
  %v312 = vunpack.c.l.b16 %v180
  %v313 = vunpack.c.l.b16 %v181
  %v314 = vunpack.c.l.b16 %v182
  %v315 = vunpack.c.l.b16 %v183
  %v316 = vunpack.c.l.b16 %v184
  %v317 = vunpack.c.l.b16 %v185
  %v318 = vunpack.c.l.b16 %v186
  %v319 = vunpack.c.l.b16 %v187
  %v320 = vunpack.c.l.b16 %v188
  %v321 = vunpack.c.l.b16 %v189
  %v322 = vunpack.c.l.b16 %v190
  %v323 = vunpack.c.l.b16 %v191
  %v324 = vunpack.c.l.b16 %v192
  %v325 = vunpack.c.l.b16 %v193
  %v326 = vunpack.c.l.b16 %v194
  %v327 = vunpack.c.l.b16 %v195
  %v328 = vunpack.c.l.b16 %v196
  %v329 = vunpack.c.l.b16 %v197
  %v330 = vunpack.c.l.b16 %v198
  %v331 = vunpack.c.l.b16 %v199
  %v332 = vunpack.c.l.b16 %v200
  %v333 = vunpack.c.l.b16 %v201
  %v334 = vunpack.c.l.b16 %v202
  %v335 = vunpack.c.l.b16 %v203
  %v336 = vunpack.c.l.b16 %v204
  %v337 = vunpack.c.l.b16 %v205
  %v338 = vunpack.c.l.b16 %v206
  %v339 = vunpack.c.l.b16 %v207
  %v340 = vunpack.c.l.b16 %v208
  %v341 = vunpack.c.l.b16 %v209
  %v342 = vunpack.c.l.b16 %v210
  %v343 = vunpack.c.l.b16 %v211
  %v344 = vpack.c.b16 %v281, %v280
  %v345 = vpack.c.b16 %v283, %v282
  %v346 = vpack.c.b16 %v285, %v284
  %v347 = vpack.c.b16 %v287, %v286
  %v348 = vpack.c.b16 %v289, %v288
  %v349 = vpack.c.b16 %v291, %v290
  %v350 = vpack.c.b16 %v293, %v292
  %v351 = vpack.c.b16 %v295, %v294
  %v352 = vpack.c.b16 %v297, %v296
  %v353 = vpack.c.b16 %v299, %v298
  %v354 = vpack.c.b16 %v301, %v300
  %v355 = vpack.c.b16 %v303, %v302
  %v356 = vpack.c.b16 %v305, %v304
  %v357 = vpack.c.b16 %v307, %v306
  %v358 = vpack.c.b16 %v309, %v308
  %v359 = vpack.c.b16 %v311, %v310
  %v360 = vpack.c.b16 %v313, %v312
  %v361 = vpack.c.b16 %v315, %v314
  %v362 = vpack.c.b16 %v317, %v316
  %v363 = vpack.c.b16 %v319, %v318
  %v364 = vpack.c.b16 %v321, %v320
  %v365 = vpack.c.b16 %v323, %v322
  %v366 = vpack.c.b16 %v325, %v324
  %v367 = vpack.c.b16 %v327, %v326
  %v368 = vpack.c.b16 %v329, %v328
  %v369 = vpack.c.b16 %v331, %v330
  %v370 = vpack.c.b16 %v333, %v332
  %v371 = vpack.c.b16 %v335, %v334
  %v372 = vpack.c.b16 %v337, %v336
  %v373 = vpack.c.b16 %v339, %v338
  %v374 = vpack.c.b16 %v341, %v340
  %v375 = vpack.c.b16 %v343, %v342
  %v380 = vunpack.c.l.b16 %v212
  %v381 = vunpack.c.l.b16 %v213
  %v382 = vunpack.c.l.b16 %v214
  %v383 = vunpack.c.l.b16 %v215
  %v384 = vpack.c.b16 %v381, %v380
  %v385 = vpack.c.b16 %v383, %v382
  %vm387 = vcmask 220160
  %v389 = vsel %vm387, %v344, 0
  %v392 = vsel %vm387, %v345, 0
  %v395 = vsel %vm387, %v346, 0
  %v398 = vsel %vm387, %v347, 0
  %v401 = vsel %vm387, %v348, 0
  %v404 = vsel %vm387, %v349, 0
  %v407 = vsel %vm387, %v350, 0
  %v410 = vsel %vm387, %v351, 0
  %v413 = vsel %vm387, %v352, 0
  %v416 = vsel %vm387, %v353, 0
  %v419 = vsel %vm387, %v354, 0
  %v422 = vsel %vm387, %v355, 0
  %v425 = vsel %vm387, %v356, 0
  %v428 = vsel %vm387, %v357, 0
  %v431 = vsel %vm387, %v358, 0
  %v434 = vsel %vm387, %v359, 0
  %v437 = vsel %vm387, %v360, 0
  %v440 = vsel %vm387, %v361, 0
  %v443 = vsel %vm387, %v362, 0
  %v446 = vsel %vm387, %v363, 0
  %v449 = vsel %vm387, %v364, 0
  %v452 = vsel %vm387, %v365, 0
  %v455 = vsel %vm387, %v366, 0
  %v458 = vsel %vm387, %v367, 0
  %v461 = vsel %vm387, %v368, 0
  %v464 = vsel %vm387, %v369, 0
  %v467 = vsel %vm387, %v370, 0
  %v470 = vsel %vm387, %v371, 0
  %v473 = vsel %vm387, %v372, 0
  %v476 = vsel %vm387, %v373, 0
  %v479 = vsel %vm387, %v374, 0
  %v482 = vsel %vm387, %v375, 0
  %vm484 = vcmask 1044480
  %vm485 = vcmask 1045504
  %v486 = vsel %vm484, 4294967295, 65535
  %v487 = vsel %vm485, %v486, 0
  %v489 = vand.u32 %v385, %v487
  %491 = vmatprep.subr.bf16.mxu0 0
  %492 = vmatpush1.bf16.msra.mxu0 0
  %493 = vmatprep.subr.bf16.mxu0 0
  %494 = vmatpush1.bf16.msra.mxu0 0
  %495 = vmatprep.subr.bf16.mxu0 0
  %496 = vmatpush1.bf16.msra.mxu0 0
  %497 = vmatprep.subr.bf16.mxu0 0
  %498 = vmatpush1.bf16.msra.mxu0 0
  %499 = vmatprep.subr.bf16.mxu0 0
  %500 = vmatpush1.bf16.msra.mxu0 0
  %501 = vmatprep.subr.bf16.mxu0 0
  %502 = vmatpush1.bf16.msra.mxu0 0
  %503 = vmatprep.subr.bf16.mxu0 0
  %504 = vmatpush1.bf16.msra.mxu0 %v489
  %505 = vmatprep.subr.bf16.mxu0 0
  %506 = vmatpush1.bf16.msra.mxu0 %v384
  %507 = vmatprep.subr.bf16.mxu0 0
  %508 = vmatpush2.bf16.msra.mxu0 0
  %509 = vmatprep.subr.bf16.mxu0 0
  %510 = vmatpush2.bf16.msra.mxu0 0
  %511 = vmatprep.subr.bf16.mxu0 0
  %512 = vmatpush2.bf16.msra.mxu0 0
  %513 = vmatprep.subr.bf16.mxu0 0
  %514 = vmatpush2.bf16.msra.mxu0 0
  %515 = vmatprep.subr.bf16.mxu0 0
  %516 = vmatpush2.bf16.msra.mxu0 0
  %517 = vmatprep.subr.bf16.mxu0 0
  %518 = vmatpush2.bf16.msra.mxu0 0
  %519 = vmatprep.subr.bf16.mxu0 0
  %520 = vmatpush2.bf16.msra.mxu0 0
  %521 = vmatprep.subr.bf16.mxu0 0
  %522 = vmatpush2.bf16.msra.mxu0 0
  %523 = vmatprep.mubr.bf16.mxu0 0
  %524 = vmatmul.mubr.bf16.gmra.mxu0 %v389
  %v525 = vpop.f32.mrf.mxu0
  %v526 = vadd.f32 0.0, %v525
  %v527 = vpop.f32.mrf.mxu0
  %v528 = vpop.f32.mrf.mxu0
  %v529 = vadd.f32 0.0, %v528
  %v530 = vpop.f32.mrf.mxu0
  %531 = vmatprep.mubr.bf16.mxu0 0
  %532 = vmatmul.mubr.bf16.gmra.mxu0 %v392
  %v533 = vpop.f32.mrf.mxu0
  %v534 = vadd.f32 0.0, %v533
  %v535 = vpop.f32.mrf.mxu0
  %v536 = vpop.f32.mrf.mxu0
  %v537 = vadd.f32 0.0, %v536
  %v538 = vpop.f32.mrf.mxu0
  %539 = vmatprep.mubr.bf16.mxu0 0
  %540 = vmatmul.mubr.bf16.gmra.mxu0 %v395
  %v541 = vpop.f32.mrf.mxu0
  %v542 = vadd.f32 0.0, %v541
  %v543 = vpop.f32.mrf.mxu0
  %v544 = vpop.f32.mrf.mxu0
  %v545 = vadd.f32 0.0, %v544
  %v546 = vpop.f32.mrf.mxu0
  %547 = vmatprep.mubr.bf16.mxu0 0
  %548 = vmatmul.mubr.bf16.gmra.mxu0 %v398
  %v549 = vpop.f32.mrf.mxu0
  %v550 = vadd.f32 0.0, %v549
  %v551 = vpop.f32.mrf.mxu0
  %v552 = vpop.f32.mrf.mxu0
  %v553 = vadd.f32 0.0, %v552
  %v554 = vpop.f32.mrf.mxu0
  %555 = vmatprep.mubr.bf16.mxu0 0
  %556 = vmatmul.mubr.bf16.gmra.mxu0 %v401
  %v557 = vpop.f32.mrf.mxu0
  %v558 = vadd.f32 0.0, %v557
  %v559 = vpop.f32.mrf.mxu0
  %v560 = vpop.f32.mrf.mxu0
  %v561 = vadd.f32 0.0, %v560
  %v562 = vpop.f32.mrf.mxu0
  %563 = vmatprep.mubr.bf16.mxu0 0
  %564 = vmatmul.mubr.bf16.gmra.mxu0 %v404
  %v565 = vpop.f32.mrf.mxu0
  %v566 = vadd.f32 0.0, %v565
  %v567 = vpop.f32.mrf.mxu0
  %v568 = vpop.f32.mrf.mxu0
  %v569 = vadd.f32 0.0, %v568
  %v570 = vpop.f32.mrf.mxu0
  %571 = vmatprep.mubr.bf16.mxu0 0
  %572 = vmatmul.mubr.bf16.gmra.mxu0 %v407
  %v573 = vpop.f32.mrf.mxu0
  %v574 = vadd.f32 0.0, %v573
  %v575 = vpop.f32.mrf.mxu0
  %v576 = vpop.f32.mrf.mxu0
  %v577 = vadd.f32 0.0, %v576
  %v578 = vpop.f32.mrf.mxu0
  %579 = vmatprep.mubr.bf16.mxu0 0
  %580 = vmatmul.mubr.bf16.gmra.mxu0 %v410
  %v581 = vpop.f32.mrf.mxu0
  %v582 = vadd.f32 0.0, %v581
  %v583 = vpop.f32.mrf.mxu0
  %v584 = vpop.f32.mrf.mxu0
  %v585 = vadd.f32 0.0, %v584
  %v586 = vpop.f32.mrf.mxu0
  %587 = vmatprep.mubr.bf16.mxu0 0
  %588 = vmatmul.mubr.bf16.gmra.mxu0 %v413
  %v589 = vpop.f32.mrf.mxu0
  %v590 = vadd.f32 0.0, %v589
  %v591 = vpop.f32.mrf.mxu0
  %v592 = vpop.f32.mrf.mxu0
  %v593 = vadd.f32 0.0, %v592
  %v594 = vpop.f32.mrf.mxu0
  %595 = vmatprep.mubr.bf16.mxu0 0
  %596 = vmatmul.mubr.bf16.gmra.mxu0 %v416
  %v597 = vpop.f32.mrf.mxu0
  %v598 = vadd.f32 0.0, %v597
  %v599 = vpop.f32.mrf.mxu0
  %v600 = vpop.f32.mrf.mxu0
  %v601 = vadd.f32 0.0, %v600
  %v602 = vpop.f32.mrf.mxu0
  %603 = vmatprep.mubr.bf16.mxu0 0
  %604 = vmatmul.mubr.bf16.gmra.mxu0 %v419
  %v605 = vpop.f32.mrf.mxu0
  %v606 = vadd.f32 0.0, %v605
  %v607 = vpop.f32.mrf.mxu0
  %v608 = vpop.f32.mrf.mxu0
  %v609 = vadd.f32 0.0, %v608
  %v610 = vpop.f32.mrf.mxu0
  %611 = vmatprep.mubr.bf16.mxu0 0
  %612 = vmatmul.mubr.bf16.gmra.mxu0 %v422
  %v613 = vpop.f32.mrf.mxu0
  %v614 = vadd.f32 0.0, %v613
  %v615 = vpop.f32.mrf.mxu0
  %v616 = vpop.f32.mrf.mxu0
  %v617 = vadd.f32 0.0, %v616
  %v618 = vpop.f32.mrf.mxu0
  %619 = vmatprep.mubr.bf16.mxu0 0
  %620 = vmatmul.mubr.bf16.gmra.mxu0 %v425
  %v621 = vpop.f32.mrf.mxu0
  %v622 = vadd.f32 0.0, %v621
  %v623 = vpop.f32.mrf.mxu0
  %v624 = vpop.f32.mrf.mxu0
  %v625 = vadd.f32 0.0, %v624
  %v626 = vpop.f32.mrf.mxu0
  %627 = vmatprep.mubr.bf16.mxu0 0
  %628 = vmatmul.mubr.bf16.gmra.mxu0 %v428
  %v629 = vpop.f32.mrf.mxu0
  %v630 = vadd.f32 0.0, %v629
  %v631 = vpop.f32.mrf.mxu0
  %v632 = vpop.f32.mrf.mxu0
  %v633 = vadd.f32 0.0, %v632
  %v634 = vpop.f32.mrf.mxu0
  %635 = vmatprep.mubr.bf16.mxu0 0
  %636 = vmatmul.mubr.bf16.gmra.mxu0 %v431
  %v637 = vpop.f32.mrf.mxu0
  %v638 = vadd.f32 0.0, %v637
  %v639 = vpop.f32.mrf.mxu0
  %v640 = vpop.f32.mrf.mxu0
  %v641 = vadd.f32 0.0, %v640
  %v642 = vpop.f32.mrf.mxu0
  %643 = vmatprep.mubr.bf16.mxu0 0
  %644 = vmatmul.mubr.bf16.gmra.mxu0 %v434
  %v645 = vpop.f32.mrf.mxu0
  %v646 = vadd.f32 0.0, %v645
  %v647 = vpop.f32.mrf.mxu0
  %v648 = vpop.f32.mrf.mxu0
  %v649 = vadd.f32 0.0, %v648
  %v650 = vpop.f32.mrf.mxu0
  %651 = vmatprep.mubr.bf16.mxu0 0
  %652 = vmatmul.mubr.bf16.gmra.mxu0 %v437
  %v653 = vpop.f32.mrf.mxu0
  %v654 = vadd.f32 0.0, %v653
  %v655 = vpop.f32.mrf.mxu0
  %v656 = vpop.f32.mrf.mxu0
  %v657 = vadd.f32 0.0, %v656
  %v658 = vpop.f32.mrf.mxu0
  %659 = vmatprep.mubr.bf16.mxu0 0
  %660 = vmatmul.mubr.bf16.gmra.mxu0 %v440
  %v661 = vpop.f32.mrf.mxu0
  %v662 = vadd.f32 0.0, %v661
  %v663 = vpop.f32.mrf.mxu0
  %v664 = vpop.f32.mrf.mxu0
  %v665 = vadd.f32 0.0, %v664
  %v666 = vpop.f32.mrf.mxu0
  %667 = vmatprep.mubr.bf16.mxu0 0
  %668 = vmatmul.mubr.bf16.gmra.mxu0 %v443
  %v669 = vpop.f32.mrf.mxu0
  %v670 = vadd.f32 0.0, %v669
  %v671 = vpop.f32.mrf.mxu0
  %v672 = vpop.f32.mrf.mxu0
  %v673 = vadd.f32 0.0, %v672
  %v674 = vpop.f32.mrf.mxu0
  %675 = vmatprep.mubr.bf16.mxu0 0
  %676 = vmatmul.mubr.bf16.gmra.mxu0 %v446
  %v677 = vpop.f32.mrf.mxu0
  %v678 = vadd.f32 0.0, %v677
  %v679 = vpop.f32.mrf.mxu0
  %v680 = vpop.f32.mrf.mxu0
  %v681 = vadd.f32 0.0, %v680
  %v682 = vpop.f32.mrf.mxu0
  %683 = vmatprep.mubr.bf16.mxu0 0
  %684 = vmatmul.mubr.bf16.gmra.mxu0 %v449
  %v685 = vpop.f32.mrf.mxu0
  %v686 = vadd.f32 0.0, %v685
  %v687 = vpop.f32.mrf.mxu0
  %v688 = vpop.f32.mrf.mxu0
  %v689 = vadd.f32 0.0, %v688
  %v690 = vpop.f32.mrf.mxu0
  %691 = vmatprep.mubr.bf16.mxu0 0
  %692 = vmatmul.mubr.bf16.gmra.mxu0 %v452
  %v693 = vpop.f32.mrf.mxu0
  %v694 = vadd.f32 0.0, %v693
  %v695 = vpop.f32.mrf.mxu0
  %v696 = vpop.f32.mrf.mxu0
  %v697 = vadd.f32 0.0, %v696
  %v698 = vpop.f32.mrf.mxu0
  %699 = vmatprep.mubr.bf16.mxu0 0
  %700 = vmatmul.mubr.bf16.gmra.mxu0 %v455
  %v701 = vpop.f32.mrf.mxu0
  %v702 = vadd.f32 0.0, %v701
  %v703 = vpop.f32.mrf.mxu0
  %v704 = vpop.f32.mrf.mxu0
  %v705 = vadd.f32 0.0, %v704
  %v706 = vpop.f32.mrf.mxu0
  %707 = vmatprep.mubr.bf16.mxu0 0
  %708 = vmatmul.mubr.bf16.gmra.mxu0 %v458
  %v709 = vpop.f32.mrf.mxu0
  %v710 = vadd.f32 0.0, %v709
  %v711 = vpop.f32.mrf.mxu0
  %v712 = vpop.f32.mrf.mxu0
  %v713 = vadd.f32 0.0, %v712
  %v714 = vpop.f32.mrf.mxu0
  %715 = vmatprep.mubr.bf16.mxu0 0
  %716 = vmatmul.mubr.bf16.gmra.mxu0 %v461
  %v717 = vpop.f32.mrf.mxu0
  %v718 = vadd.f32 0.0, %v717
  %v719 = vpop.f32.mrf.mxu0
  %v720 = vpop.f32.mrf.mxu0
  %v721 = vadd.f32 0.0, %v720
  %v722 = vpop.f32.mrf.mxu0
  %723 = vmatprep.mubr.bf16.mxu0 0
  %724 = vmatmul.mubr.bf16.gmra.mxu0 %v464
  %v725 = vpop.f32.mrf.mxu0
  %v726 = vadd.f32 0.0, %v725
  %v727 = vpop.f32.mrf.mxu0
  %v728 = vpop.f32.mrf.mxu0
  %v729 = vadd.f32 0.0, %v728
  %v730 = vpop.f32.mrf.mxu0
  %731 = vmatprep.mubr.bf16.mxu0 0
  %732 = vmatmul.mubr.bf16.gmra.mxu0 %v467
  %v733 = vpop.f32.mrf.mxu0
  %v734 = vadd.f32 0.0, %v733
  %v735 = vpop.f32.mrf.mxu0
  %v736 = vpop.f32.mrf.mxu0
  %v737 = vadd.f32 0.0, %v736
  %v738 = vpop.f32.mrf.mxu0
  %739 = vmatprep.mubr.bf16.mxu0 0
  %740 = vmatmul.mubr.bf16.gmra.mxu0 %v470
  %v741 = vpop.f32.mrf.mxu0
  %v742 = vadd.f32 0.0, %v741
  %v743 = vpop.f32.mrf.mxu0
  %v744 = vpop.f32.mrf.mxu0
  %v745 = vadd.f32 0.0, %v744
  %v746 = vpop.f32.mrf.mxu0
  %747 = vmatprep.mubr.bf16.mxu0 0
  %748 = vmatmul.mubr.bf16.gmra.mxu0 %v473
  %v749 = vpop.f32.mrf.mxu0
  %v750 = vadd.f32 0.0, %v749
  %v751 = vpop.f32.mrf.mxu0
  %v752 = vpop.f32.mrf.mxu0
  %v753 = vadd.f32 0.0, %v752
  %v754 = vpop.f32.mrf.mxu0
  %755 = vmatprep.mubr.bf16.mxu0 0
  %756 = vmatmul.mubr.bf16.gmra.mxu0 %v476
  %v757 = vpop.f32.mrf.mxu0
  %v758 = vadd.f32 0.0, %v757
  %v759 = vpop.f32.mrf.mxu0
  %v760 = vpop.f32.mrf.mxu0
  %v761 = vadd.f32 0.0, %v760
  %v762 = vpop.f32.mrf.mxu0
  %763 = vmatprep.mubr.bf16.mxu0 0
  %764 = vmatmul.mubr.bf16.gmra.mxu0 %v479
  %v765 = vpop.f32.mrf.mxu0
  %v766 = vadd.f32 0.0, %v765
  %v767 = vpop.f32.mrf.mxu0
  %v768 = vpop.f32.mrf.mxu0
  %v769 = vadd.f32 0.0, %v768
  %v770 = vpop.f32.mrf.mxu0
  %771 = vmatprep.mubr.bf16.mxu0 0
  %772 = vmatmul.mubr.bf16.gmra.mxu0 %v482
  %v773 = vpop.f32.mrf.mxu0
  %v774 = vadd.f32 0.0, %v773
  %v775 = vpop.f32.mrf.mxu0
  %v776 = vpop.f32.mrf.mxu0
  %v777 = vadd.f32 0.0, %v776
  %v778 = vpop.f32.mrf.mxu0
  %779 = vdwg.mxu0
  %v780 = vadd.f32 %v84, %v526
  %v781 = vadd.f32 %v85, %v529
  %v782 = vadd.f32 %v86, %v534
  %v783 = vadd.f32 %v87, %v537
  %v784 = vadd.f32 %v88, %v542
  %v785 = vadd.f32 %v89, %v545
  %v786 = vadd.f32 %v90, %v550
  %v787 = vadd.f32 %v91, %v553
  %v788 = vadd.f32 %v92, %v558
  %v789 = vadd.f32 %v93, %v561
  %v790 = vadd.f32 %v94, %v566
  %v791 = vadd.f32 %v95, %v569
  %v792 = vadd.f32 %v96, %v574
  %v793 = vadd.f32 %v97, %v577
  %v794 = vadd.f32 %v98, %v582
  %v795 = vadd.f32 %v99, %v585
  %v796 = vadd.f32 %v100, %v590
  %v797 = vadd.f32 %v101, %v593
  %v798 = vadd.f32 %v102, %v598
  %v799 = vadd.f32 %v103, %v601
  %v800 = vadd.f32 %v104, %v606
  %v801 = vadd.f32 %v105, %v609
  %v802 = vadd.f32 %v106, %v614
  %v803 = vadd.f32 %v107, %v617
  %v804 = vadd.f32 %v108, %v622
  %v805 = vadd.f32 %v109, %v625
  %v806 = vadd.f32 %v110, %v630
  %v807 = vadd.f32 %v111, %v633
  %v808 = vadd.f32 %v112, %v638
  %v809 = vadd.f32 %v113, %v641
  %v810 = vadd.f32 %v114, %v646
  %v811 = vadd.f32 %v115, %v649
  %v812 = vadd.f32 %v116, %v654
  %v813 = vadd.f32 %v117, %v657
  %v814 = vadd.f32 %v118, %v662
  %v815 = vadd.f32 %v119, %v665
  %v816 = vadd.f32 %v120, %v670
  %v817 = vadd.f32 %v121, %v673
  %v818 = vadd.f32 %v122, %v678
  %v819 = vadd.f32 %v123, %v681
  %v820 = vadd.f32 %v124, %v686
  %v821 = vadd.f32 %v125, %v689
  %v822 = vadd.f32 %v126, %v694
  %v823 = vadd.f32 %v127, %v697
  %v824 = vadd.f32 %v128, %v702
  %v825 = vadd.f32 %v129, %v705
  %v826 = vadd.f32 %v130, %v710
  %v827 = vadd.f32 %v131, %v713
  %v828 = vadd.f32 %v132, %v718
  %v829 = vadd.f32 %v133, %v721
  %v830 = vadd.f32 %v134, %v726
  %v831 = vadd.f32 %v135, %v729
  %v832 = vadd.f32 %v136, %v734
  %v833 = vadd.f32 %v137, %v737
  %v834 = vadd.f32 %v138, %v742
  %v835 = vadd.f32 %v139, %v745
  %v836 = vadd.f32 %v140, %v750
  %v837 = vadd.f32 %v141, %v753
  %v838 = vadd.f32 %v142, %v758
  %v839 = vadd.f32 %v143, %v761
  %v840 = vadd.f32 %v144, %v766
  %v841 = vadd.f32 %v145, %v769
  %v842 = vadd.f32 %v146, %v774
  %v843 = vadd.f32 %v147, %v777
  %vm844 = vcmask 523264
  %845 = vst.msk [vmem:[#allocation2] sm:$0xff] %vm844, %v780
  %846 = vst.msk [vmem:[#allocation2 + $0x8] sm:$0xff] %vm844, %v781
  %847 = vst.msk [vmem:[#allocation2 + $0x10] sm:$0xff] %vm844, %v782
  %848 = vst.msk [vmem:[#allocation2 + $0x18] sm:$0xff] %vm844, %v783
  %849 = vst.msk [vmem:[#allocation2 + $0x20] sm:$0xff] %vm844, %v784
  %850 = vst.msk [vmem:[#allocation2 + $0x28] sm:$0xff] %vm844, %v785
  %851 = vst.msk [vmem:[#allocation2 + $0x30] sm:$0xff] %vm844, %v786
  %852 = vst.msk [vmem:[#allocation2 + $0x38] sm:$0xff] %vm844, %v787
  %853 = vst.msk [vmem:[#allocation2 + $0x40] sm:$0xff] %vm844, %v788
  %854 = vst.msk [vmem:[#allocation2 + $0x48] sm:$0xff] %vm844, %v789
  %855 = vst.msk [vmem:[#allocation2 + $0x50] sm:$0xff] %vm844, %v790
  %856 = vst.msk [vmem:[#allocation2 + $0x58] sm:$0xff] %vm844, %v791
  %857 = vst.msk [vmem:[#allocation2 + $0x60] sm:$0xff] %vm844, %v792
  %858 = vst.msk [vmem:[#allocation2 + $0x68] sm:$0xff] %vm844, %v793
  %859 = vst.msk [vmem:[#allocation2 + $0x70] sm:$0xff] %vm844, %v794
  %860 = vst.msk [vmem:[#allocation2 + $0x78] sm:$0xff] %vm844, %v795
  %861 = vst.msk [vmem:[#allocation2 + $0x80] sm:$0xff] %vm844, %v796
  %862 = vst.msk [vmem:[#allocation2 + $0x88] sm:$0xff] %vm844, %v797
  %863 = vst.msk [vmem:[#allocation2 + $0x90] sm:$0xff] %vm844, %v798
  %864 = vst.msk [vmem:[#allocation2 + $0x98] sm:$0xff] %vm844, %v799
  %865 = vst.msk [vmem:[#allocation2 + $0xa0] sm:$0xff] %vm844, %v800
  %866 = vst.msk [vmem:[#allocation2 + $0xa8] sm:$0xff] %vm844, %v801
  %867 = vst.msk [vmem:[#allocation2 + $0xb0] sm:$0xff] %vm844, %v802
  %868 = vst.msk [vmem:[#allocation2 + $0xb8] sm:$0xff] %vm844, %v803
  %869 = vst.msk [vmem:[#allocation2 + $0xc0] sm:$0xff] %vm844, %v804
  %870 = vst.msk [vmem:[#allocation2 + $0xc8] sm:$0xff] %vm844, %v805
  %871 = vst.msk [vmem:[#allocation2 + $0xd0] sm:$0xff] %vm844, %v806
  %872 = vst.msk [vmem:[#allocation2 + $0xd8] sm:$0xff] %vm844, %v807
  %873 = vst.msk [vmem:[#allocation2 + $0xe0] sm:$0xff] %vm844, %v808
  %874 = vst.msk [vmem:[#allocation2 + $0xe8] sm:$0xff] %vm844, %v809
  %875 = vst.msk [vmem:[#allocation2 + $0xf0] sm:$0xff] %vm844, %v810
  %876 = vst.msk [vmem:[#allocation2 + $0xf8] sm:$0xff] %vm844, %v811
  %877 = vst.msk [vmem:[#allocation2 + $0x100] sm:$0xff] %vm844, %v812
  %878 = vst.msk [vmem:[#allocation2 + $0x108] sm:$0xff] %vm844, %v813
  %879 = vst.msk [vmem:[#allocation2 + $0x110] sm:$0xff] %vm844, %v814
  %880 = vst.msk [vmem:[#allocation2 + $0x118] sm:$0xff] %vm844, %v815
  %881 = vst.msk [vmem:[#allocation2 + $0x120] sm:$0xff] %vm844, %v816
  %882 = vst.msk [vmem:[#allocation2 + $0x128] sm:$0xff] %vm844, %v817
  %883 = vst.msk [vmem:[#allocation2 + $0x130] sm:$0xff] %vm844, %v818
  %884 = vst.msk [vmem:[#allocation2 + $0x138] sm:$0xff] %vm844, %v819
  %885 = vst.msk [vmem:[#allocation2 + $0x140] sm:$0xff] %vm844, %v820
  %886 = vst.msk [vmem:[#allocation2 + $0x148] sm:$0xff] %vm844, %v821
  %887 = vst.msk [vmem:[#allocation2 + $0x150] sm:$0xff] %vm844, %v822
  %888 = vst.msk [vmem:[#allocation2 + $0x158] sm:$0xff] %vm844, %v823
  %889 = vst.msk [vmem:[#allocation2 + $0x160] sm:$0xff] %vm844, %v824
  %890 = vst.msk [vmem:[#allocation2 + $0x168] sm:$0xff] %vm844, %v825
  %891 = vst.msk [vmem:[#allocation2 + $0x170] sm:$0xff] %vm844, %v826
  %892 = vst.msk [vmem:[#allocation2 + $0x178] sm:$0xff] %vm844, %v827
  %893 = vst.msk [vmem:[#allocation2 + $0x180] sm:$0xff] %vm844, %v828
  %894 = vst.msk [vmem:[#allocation2 + $0x188] sm:$0xff] %vm844, %v829
  %895 = vst.msk [vmem:[#allocation2 + $0x190] sm:$0xff] %vm844, %v830
  %896 = vst.msk [vmem:[#allocation2 + $0x198] sm:$0xff] %vm844, %v831
  %897 = vst.msk [vmem:[#allocation2 + $0x1a0] sm:$0xff] %vm844, %v832
  %898 = vst.msk [vmem:[#allocation2 + $0x1a8] sm:$0xff] %vm844, %v833
  %899 = vst.msk [vmem:[#allocation2 + $0x1b0] sm:$0xff] %vm844, %v834
  %900 = vst.msk [vmem:[#allocation2 + $0x1b8] sm:$0xff] %vm844, %v835
  %901 = vst.msk [vmem:[#allocation2 + $0x1c0] sm:$0xff] %vm844, %v836
  %902 = vst.msk [vmem:[#allocation2 + $0x1c8] sm:$0xff] %vm844, %v837
  %903 = vst.msk [vmem:[#allocation2 + $0x1d0] sm:$0xff] %vm844, %v838
  %904 = vst.msk [vmem:[#allocation2 + $0x1d8] sm:$0xff] %vm844, %v839
  %905 = vst.msk [vmem:[#allocation2 + $0x1e0] sm:$0xff] %vm844, %v840
  %906 = vst.msk [vmem:[#allocation2 + $0x1e8] sm:$0xff] %vm844, %v841
  %907 = vst.msk [vmem:[#allocation2 + $0x1f0] sm:$0xff] %vm844, %v842
  %908 = vst.msk [vmem:[#allocation2 + $0x1f8] sm:$0xff] %vm844, %v843
  // Predicated region
  $region18: #{tpu_custom_call.1} parent=0 // pred_check
    %p909 = pneg %p15
  $region19: #{tpu_custom_call.1} parent=0 // pred_check_branch
    %911 = sbr.rel (%p909) target = $region21
  $region20: #{tpu_custom_call.1} parent=0 // pred_region
    %v912 = vld [vmem:[#allocation2] sm:$0xff]
    %v913 = vld [vmem:[#allocation2 + $0x8] sm:$0xff]
    %v914 = vld [vmem:[#allocation2 + $0x10] sm:$0xff]
    %v915 = vld [vmem:[#allocation2 + $0x18] sm:$0xff]
    %v916 = vld [vmem:[#allocation2 + $0x20] sm:$0xff]
    %v917 = vld [vmem:[#allocation2 + $0x28] sm:$0xff]
    %v918 = vld [vmem:[#allocation2 + $0x30] sm:$0xff]
    %v919 = vld [vmem:[#allocation2 + $0x38] sm:$0xff]
    %v920 = vld [vmem:[#allocation2 + $0x40] sm:$0xff]
    %v921 = vld [vmem:[#allocation2 + $0x48] sm:$0xff]
    %v922 = vld [vmem:[#allocation2 + $0x50] sm:$0xff]
    %v923 = vld [vmem:[#allocation2 + $0x58] sm:$0xff]
    %v924 = vld [vmem:[#allocation2 + $0x60] sm:$0xff]
    %v925 = vld [vmem:[#allocation2 + $0x68] sm:$0xff]
    %v926 = vld [vmem:[#allocation2 + $0x70] sm:$0xff]
    %v927 = vld [vmem:[#allocation2 + $0x78] sm:$0xff]
    %v928 = vld [vmem:[#allocation2 + $0x80] sm:$0xff]
    %v929 = vld [vmem:[#allocation2 + $0x88] sm:$0xff]
    %v930 = vld [vmem:[#allocation2 + $0x90] sm:$0xff]
    %v931 = vld [vmem:[#allocation2 + $0x98] sm:$0xff]
    %v932 = vld [vmem:[#allocation2 + $0xa0] sm:$0xff]
    %v933 = vld [vmem:[#allocation2 + $0xa8] sm:$0xff]
    %v934 = vld [vmem:[#allocation2 + $0xb0] sm:$0xff]
    %v935 = vld [vmem:[#allocation2 + $0xb8] sm:$0xff]
    %v936 = vld [vmem:[#allocation2 + $0xc0] sm:$0xff]
    %v937 = vld [vmem:[#allocation2 + $0xc8] sm:$0xff]
    %v938 = vld [vmem:[#allocation2 + $0xd0] sm:$0xff]
    %v939 = vld [vmem:[#allocation2 + $0xd8] sm:$0xff]
    %v940 = vld [vmem:[#allocation2 + $0xe0] sm:$0xff]
    %v941 = vld [vmem:[#allocation2 + $0xe8] sm:$0xff]
    %v942 = vld [vmem:[#allocation2 + $0xf0] sm:$0xff]
    %v943 = vld [vmem:[#allocation2 + $0xf8] sm:$0xff]
    %v944 = vld [vmem:[#allocation2 + $0x100] sm:$0xff]
    %v945 = vld [vmem:[#allocation2 + $0x108] sm:$0xff]
    %v946 = vld [vmem:[#allocation2 + $0x110] sm:$0xff]
    %v947 = vld [vmem:[#allocation2 + $0x118] sm:$0xff]
    %v948 = vld [vmem:[#allocation2 + $0x120] sm:$0xff]
    %v949 = vld [vmem:[#allocation2 + $0x128] sm:$0xff]
    %v950 = vld [vmem:[#allocation2 + $0x130] sm:$0xff]
    %v951 = vld [vmem:[#allocation2 + $0x138] sm:$0xff]
    %v952 = vld [vmem:[#allocation2 + $0x140] sm:$0xff]
    %v953 = vld [vmem:[#allocation2 + $0x148] sm:$0xff]
    %v954 = vld [vmem:[#allocation2 + $0x150] sm:$0xff]
    %v955 = vld [vmem:[#allocation2 + $0x158] sm:$0xff]
    %v956 = vld [vmem:[#allocation2 + $0x160] sm:$0xff]
    %v957 = vld [vmem:[#allocation2 + $0x168] sm:$0xff]
    %v958 = vld [vmem:[#allocation2 + $0x170] sm:$0xff]
    %v959 = vld [vmem:[#allocation2 + $0x178] sm:$0xff]
    %v960 = vld [vmem:[#allocation2 + $0x180] sm:$0xff]
    %v961 = vld [vmem:[#allocation2 + $0x188] sm:$0xff]
    %v962 = vld [vmem:[#allocation2 + $0x190] sm:$0xff]
    %v963 = vld [vmem:[#allocation2 + $0x198] sm:$0xff]
    %v964 = vld [vmem:[#allocation2 + $0x1a0] sm:$0xff]
    %v965 = vld [vmem:[#allocation2 + $0x1a8] sm:$0xff]
    %v966 = vld [vmem:[#allocation2 + $0x1b0] sm:$0xff]
    %v967 = vld [vmem:[#allocation2 + $0x1b8] sm:$0xff]
    %v968 = vld [vmem:[#allocation2 + $0x1c0] sm:$0xff]
    %v969 = vld [vmem:[#allocation2 + $0x1c8] sm:$0xff]
    %v970 = vld [vmem:[#allocation2 + $0x1d0] sm:$0xff]
    %v971 = vld [vmem:[#allocation2 + $0x1d8] sm:$0xff]
    %v972 = vld [vmem:[#allocation2 + $0x1e0] sm:$0xff]
    %v973 = vld [vmem:[#allocation2 + $0x1e8] sm:$0xff]
    %v974 = vld [vmem:[#allocation2 + $0x1f0] sm:$0xff]
    %v975 = vld [vmem:[#allocation2 + $0x1f8] sm:$0xff]
    %v976 = vld [vmem:[%s2] sm:$0x1]
    %v978 = vlaneseq
    %v979 = vshrl.u32 %v978, 7
    %v980 = vsub.s32 0, %v979
    %v981 = vrot.slane %v976, %v980
    %v983 = vadd.f32 %v912, %v981
    %v984 = vadd.f32 %v913, %v981
    %v985 = vadd.f32 %v914, %v981
    %v986 = vadd.f32 %v915, %v981
    %v987 = vadd.f32 %v916, %v981
    %v988 = vadd.f32 %v917, %v981
    %v989 = vadd.f32 %v918, %v981
    %v990 = vadd.f32 %v919, %v981
    %v991 = vadd.f32 %v920, %v981
    %v992 = vadd.f32 %v921, %v981
    %v993 = vadd.f32 %v922, %v981
    %v994 = vadd.f32 %v923, %v981
    %v995 = vadd.f32 %v924, %v981
    %v996 = vadd.f32 %v925, %v981
    %v997 = vadd.f32 %v926, %v981
    %v998 = vadd.f32 %v927, %v981
    %v999 = vadd.f32 %v928, %v981
    %v1000 = vadd.f32 %v929, %v981
    %v1001 = vadd.f32 %v930, %v981
    %v1002 = vadd.f32 %v931, %v981
    %v1003 = vadd.f32 %v932, %v981
    %v1004 = vadd.f32 %v933, %v981
    %v1005 = vadd.f32 %v934, %v981
    %v1006 = vadd.f32 %v935, %v981
    %v1007 = vadd.f32 %v936, %v981
    %v1008 = vadd.f32 %v937, %v981
    %v1009 = vadd.f32 %v938, %v981
    %v1010 = vadd.f32 %v939, %v981
    %v1011 = vadd.f32 %v940, %v981
    %v1012 = vadd.f32 %v941, %v981
    %v1013 = vadd.f32 %v942, %v981
    %v1014 = vadd.f32 %v943, %v981
    %v1015 = vadd.f32 %v944, %v981
    %v1016 = vadd.f32 %v945, %v981
    %v1017 = vadd.f32 %v946, %v981
    %v1018 = vadd.f32 %v947, %v981
    %v1019 = vadd.f32 %v948, %v981
    %v1020 = vadd.f32 %v949, %v981
    %v1021 = vadd.f32 %v950, %v981
    %v1022 = vadd.f32 %v951, %v981
    %v1023 = vadd.f32 %v952, %v981
    %v1024 = vadd.f32 %v953, %v981
    %v1025 = vadd.f32 %v954, %v981
    %v1026 = vadd.f32 %v955, %v981
    %v1027 = vadd.f32 %v956, %v981
    %v1028 = vadd.f32 %v957, %v981
    %v1029 = vadd.f32 %v958, %v981
    %v1030 = vadd.f32 %v959, %v981
    %v1031 = vadd.f32 %v960, %v981
    %v1032 = vadd.f32 %v961, %v981
    %v1033 = vadd.f32 %v962, %v981
    %v1034 = vadd.f32 %v963, %v981
    %v1035 = vadd.f32 %v964, %v981
    %v1036 = vadd.f32 %v965, %v981
    %v1037 = vadd.f32 %v966, %v981
    %v1038 = vadd.f32 %v967, %v981
    %v1039 = vadd.f32 %v968, %v981
    %v1040 = vadd.f32 %v969, %v981
    %v1041 = vadd.f32 %v970, %v981
    %v1042 = vadd.f32 %v971, %v981
    %v1043 = vadd.f32 %v972, %v981
    %v1044 = vadd.f32 %v973, %v981
    %v1045 = vadd.f32 %v974, %v981
    %v1046 = vadd.f32 %v975, %v981
    %v1047 = vmax.f32 %v983, 0.0
    %v1048 = vmax.f32 %v984, 0.0
    %v1049 = vmax.f32 %v985, 0.0
    %v1050 = vmax.f32 %v986, 0.0
    %v1051 = vmax.f32 %v987, 0.0
    %v1052 = vmax.f32 %v988, 0.0
    %v1053 = vmax.f32 %v989, 0.0
    %v1054 = vmax.f32 %v990, 0.0
    %v1055 = vmax.f32 %v991, 0.0
    %v1056 = vmax.f32 %v992, 0.0
    %v1057 = vmax.f32 %v993, 0.0
    %v1058 = vmax.f32 %v994, 0.0
    %v1059 = vmax.f32 %v995, 0.0
    %v1060 = vmax.f32 %v996, 0.0
    %v1061 = vmax.f32 %v997, 0.0
    %v1062 = vmax.f32 %v998, 0.0
    %v1063 = vmax.f32 %v999, 0.0
    %v1064 = vmax.f32 %v1000, 0.0
    %v1065 = vmax.f32 %v1001, 0.0
    %v1066 = vmax.f32 %v1002, 0.0
    %v1067 = vmax.f32 %v1003, 0.0
    %v1068 = vmax.f32 %v1004, 0.0
    %v1069 = vmax.f32 %v1005, 0.0
    %v1070 = vmax.f32 %v1006, 0.0
    %v1071 = vmax.f32 %v1007, 0.0
    %v1072 = vmax.f32 %v1008, 0.0
    %v1073 = vmax.f32 %v1009, 0.0
    %v1074 = vmax.f32 %v1010, 0.0
    %v1075 = vmax.f32 %v1011, 0.0
    %v1076 = vmax.f32 %v1012, 0.0
    %v1077 = vmax.f32 %v1013, 0.0
    %v1078 = vmax.f32 %v1014, 0.0
    %v1079 = vmax.f32 %v1015, 0.0
    %v1080 = vmax.f32 %v1016, 0.0
    %v1081 = vmax.f32 %v1017, 0.0
    %v1082 = vmax.f32 %v1018, 0.0
    %v1083 = vmax.f32 %v1019, 0.0
    %v1084 = vmax.f32 %v1020, 0.0
    %v1085 = vmax.f32 %v1021, 0.0
    %v1086 = vmax.f32 %v1022, 0.0
    %v1087 = vmax.f32 %v1023, 0.0
    %v1088 = vmax.f32 %v1024, 0.0
    %v1089 = vmax.f32 %v1025, 0.0
    %v1090 = vmax.f32 %v1026, 0.0
    %v1091 = vmax.f32 %v1027, 0.0
    %v1092 = vmax.f32 %v1028, 0.0
    %v1093 = vmax.f32 %v1029, 0.0
    %v1094 = vmax.f32 %v1030, 0.0
    %v1095 = vmax.f32 %v1031, 0.0
    %v1096 = vmax.f32 %v1032, 0.0
    %v1097 = vmax.f32 %v1033, 0.0
    %v1098 = vmax.f32 %v1034, 0.0
    %v1099 = vmax.f32 %v1035, 0.0
    %v1100 = vmax.f32 %v1036, 0.0
    %v1101 = vmax.f32 %v1037, 0.0
    %v1102 = vmax.f32 %v1038, 0.0
    %v1103 = vmax.f32 %v1039, 0.0
    %v1104 = vmax.f32 %v1040, 0.0
    %v1105 = vmax.f32 %v1041, 0.0
    %v1106 = vmax.f32 %v1042, 0.0
    %v1107 = vmax.f32 %v1043, 0.0
    %v1108 = vmax.f32 %v1044, 0.0
    %v1109 = vmax.f32 %v1045, 0.0
    %v1110 = vmax.f32 %v1046, 0.0
    %v1111 = vpack.c.bf16 %v1048, %v1047
    %v1112 = vpack.c.bf16 %v1050, %v1049
    %v1113 = vpack.c.bf16 %v1052, %v1051
    %v1114 = vpack.c.bf16 %v1054, %v1053
    %v1115 = vpack.c.bf16 %v1056, %v1055
    %v1116 = vpack.c.bf16 %v1058, %v1057
    %v1117 = vpack.c.bf16 %v1060, %v1059
    %v1118 = vpack.c.bf16 %v1062, %v1061
    %v1119 = vpack.c.bf16 %v1064, %v1063
    %v1120 = vpack.c.bf16 %v1066, %v1065
    %v1121 = vpack.c.bf16 %v1068, %v1067
    %v1122 = vpack.c.bf16 %v1070, %v1069
    %v1123 = vpack.c.bf16 %v1072, %v1071
    %v1124 = vpack.c.bf16 %v1074, %v1073
    %v1125 = vpack.c.bf16 %v1076, %v1075
    %v1126 = vpack.c.bf16 %v1078, %v1077
    %v1127 = vpack.c.bf16 %v1080, %v1079
    %v1128 = vpack.c.bf16 %v1082, %v1081
    %v1129 = vpack.c.bf16 %v1084, %v1083
    %v1130 = vpack.c.bf16 %v1086, %v1085
    %v1131 = vpack.c.bf16 %v1088, %v1087
    %v1132 = vpack.c.bf16 %v1090, %v1089
    %v1133 = vpack.c.bf16 %v1092, %v1091
    %v1134 = vpack.c.bf16 %v1094, %v1093
    %v1135 = vpack.c.bf16 %v1096, %v1095
    %v1136 = vpack.c.bf16 %v1098, %v1097
    %v1137 = vpack.c.bf16 %v1100, %v1099
    %v1138 = vpack.c.bf16 %v1102, %v1101
    %v1139 = vpack.c.bf16 %v1104, %v1103
    %v1140 = vpack.c.bf16 %v1106, %v1105
    %v1141 = vpack.c.bf16 %v1108, %v1107
    %v1142 = vpack.c.bf16 %v1110, %v1109
    %v1175 = vunpack.c.l.b16 %v1111
    %v1176 = vunpack.c.h.b16 %v1111
    %v1177 = vunpack.c.l.b16 %v1112
    %v1178 = vunpack.c.h.b16 %v1112
    %v1179 = vunpack.c.l.b16 %v1113
    %v1180 = vunpack.c.h.b16 %v1113
    %v1181 = vunpack.c.l.b16 %v1114
    %v1182 = vunpack.c.h.b16 %v1114
    %v1183 = vunpack.c.l.b16 %v1115
    %v1184 = vunpack.c.h.b16 %v1115
    %v1185 = vunpack.c.l.b16 %v1116
    %v1186 = vunpack.c.h.b16 %v1116
    %v1187 = vunpack.c.l.b16 %v1117
    %v1188 = vunpack.c.h.b16 %v1117
    %v1189 = vunpack.c.l.b16 %v1118
    %v1190 = vunpack.c.h.b16 %v1118
    %v1191 = vunpack.c.l.b16 %v1119
    %v1192 = vunpack.c.h.b16 %v1119
    %v1193 = vunpack.c.l.b16 %v1120
    %v1194 = vunpack.c.h.b16 %v1120
    %v1195 = vunpack.c.l.b16 %v1121
    %v1196 = vunpack.c.h.b16 %v1121
    %v1197 = vunpack.c.l.b16 %v1122
    %v1198 = vunpack.c.h.b16 %v1122
    %v1199 = vunpack.c.l.b16 %v1123
    %v1200 = vunpack.c.h.b16 %v1123
    %v1201 = vunpack.c.l.b16 %v1124
    %v1202 = vunpack.c.h.b16 %v1124
    %v1203 = vunpack.c.l.b16 %v1125
    %v1204 = vunpack.c.h.b16 %v1125
    %v1205 = vunpack.c.l.b16 %v1126
    %v1206 = vunpack.c.h.b16 %v1126
    %v1207 = vunpack.c.l.b16 %v1127
    %v1208 = vunpack.c.h.b16 %v1127
    %v1209 = vunpack.c.l.b16 %v1128
    %v1210 = vunpack.c.h.b16 %v1128
    %v1211 = vunpack.c.l.b16 %v1129
    %v1212 = vunpack.c.h.b16 %v1129
    %v1213 = vunpack.c.l.b16 %v1130
    %v1214 = vunpack.c.h.b16 %v1130
    %v1215 = vunpack.c.l.b16 %v1131
    %v1216 = vunpack.c.h.b16 %v1131
    %v1217 = vunpack.c.l.b16 %v1132
    %v1218 = vunpack.c.h.b16 %v1132
    %v1219 = vunpack.c.l.b16 %v1133
    %v1220 = vunpack.c.h.b16 %v1133
    %v1221 = vunpack.c.l.b16 %v1134
    %v1222 = vunpack.c.h.b16 %v1134
    %v1223 = vunpack.c.l.b16 %v1135
    %v1224 = vunpack.c.h.b16 %v1135
    %v1225 = vunpack.c.l.b16 %v1136
    %v1226 = vunpack.c.h.b16 %v1136
    %v1227 = vunpack.c.l.b16 %v1137
    %v1228 = vunpack.c.h.b16 %v1137
    %v1229 = vunpack.c.l.b16 %v1138
    %v1230 = vunpack.c.h.b16 %v1138
    %v1231 = vunpack.c.l.b16 %v1139
    %v1232 = vunpack.c.h.b16 %v1139
    %v1233 = vunpack.c.l.b16 %v1140
    %v1234 = vunpack.c.h.b16 %v1140
    %v1235 = vunpack.c.l.b16 %v1141
    %v1236 = vunpack.c.h.b16 %v1141
    %v1237 = vunpack.c.l.b16 %v1142
    %v1238 = vunpack.c.h.b16 %v1142
    %v1239 = vpack.c.b16 %v1175, %v1175
    %v1240 = vpack.c.b16 %v1176, %v1176
    %v1241 = vpack.c.b16 %v1177, %v1177
    %v1242 = vpack.c.b16 %v1178, %v1178
    %v1243 = vpack.c.b16 %v1179, %v1179
    %v1244 = vpack.c.b16 %v1180, %v1180
    %v1245 = vpack.c.b16 %v1181, %v1181
    %v1246 = vpack.c.b16 %v1182, %v1182
    %v1247 = vpack.c.b16 %v1183, %v1183
    %v1248 = vpack.c.b16 %v1184, %v1184
    %v1249 = vpack.c.b16 %v1185, %v1185
    %v1250 = vpack.c.b16 %v1186, %v1186
    %v1251 = vpack.c.b16 %v1187, %v1187
    %v1252 = vpack.c.b16 %v1188, %v1188
    %v1253 = vpack.c.b16 %v1189, %v1189
    %v1254 = vpack.c.b16 %v1190, %v1190
    %v1255 = vpack.c.b16 %v1191, %v1191
    %v1256 = vpack.c.b16 %v1192, %v1192
    %v1257 = vpack.c.b16 %v1193, %v1193
    %v1258 = vpack.c.b16 %v1194, %v1194
    %v1259 = vpack.c.b16 %v1195, %v1195
    %v1260 = vpack.c.b16 %v1196, %v1196
    %v1261 = vpack.c.b16 %v1197, %v1197
    %v1262 = vpack.c.b16 %v1198, %v1198
    %v1263 = vpack.c.b16 %v1199, %v1199
    %v1264 = vpack.c.b16 %v1200, %v1200
    %v1265 = vpack.c.b16 %v1201, %v1201
    %v1266 = vpack.c.b16 %v1202, %v1202
    %v1267 = vpack.c.b16 %v1203, %v1203
    %v1268 = vpack.c.b16 %v1204, %v1204
    %v1269 = vpack.c.b16 %v1205, %v1205
    %v1270 = vpack.c.b16 %v1206, %v1206
    %v1271 = vpack.c.b16 %v1207, %v1207
    %v1272 = vpack.c.b16 %v1208, %v1208
    %v1273 = vpack.c.b16 %v1209, %v1209
    %v1274 = vpack.c.b16 %v1210, %v1210
    %v1275 = vpack.c.b16 %v1211, %v1211
    %v1276 = vpack.c.b16 %v1212, %v1212
    %v1277 = vpack.c.b16 %v1213, %v1213
    %v1278 = vpack.c.b16 %v1214, %v1214
    %v1279 = vpack.c.b16 %v1215, %v1215
    %v1280 = vpack.c.b16 %v1216, %v1216
    %v1281 = vpack.c.b16 %v1217, %v1217
    %v1282 = vpack.c.b16 %v1218, %v1218
    %v1283 = vpack.c.b16 %v1219, %v1219
    %v1284 = vpack.c.b16 %v1220, %v1220
    %v1285 = vpack.c.b16 %v1221, %v1221
    %v1286 = vpack.c.b16 %v1222, %v1222
    %v1287 = vpack.c.b16 %v1223, %v1223
    %v1288 = vpack.c.b16 %v1224, %v1224
    %v1289 = vpack.c.b16 %v1225, %v1225
    %v1290 = vpack.c.b16 %v1226, %v1226
    %v1291 = vpack.c.b16 %v1227, %v1227
    %v1292 = vpack.c.b16 %v1228, %v1228
    %v1293 = vpack.c.b16 %v1229, %v1229
    %v1294 = vpack.c.b16 %v1230, %v1230
    %v1295 = vpack.c.b16 %v1231, %v1231
    %v1296 = vpack.c.b16 %v1232, %v1232
    %v1297 = vpack.c.b16 %v1233, %v1233
    %v1298 = vpack.c.b16 %v1234, %v1234
    %v1299 = vpack.c.b16 %v1235, %v1235
    %v1300 = vpack.c.b16 %v1236, %v1236
    %v1301 = vpack.c.b16 %v1237, %v1237
    %v1302 = vpack.c.b16 %v1238, %v1238
    %vm1367 = vcmask 519168
    %1368 = vst.msk [vmem:[%s3] sm:$0xf] %vm1367, %v1239
    %1369 = vst.msk [vmem:[%s3 + $0x4] sm:$0xf] %vm1367, %v1240
    %1370 = vst.msk [vmem:[%s3 + $0x8] sm:$0xf] %vm1367, %v1241
    %1371 = vst.msk [vmem:[%s3 + $0xc] sm:$0xf] %vm1367, %v1242
    %1372 = vst.msk [vmem:[%s3 + $0x10] sm:$0xf] %vm1367, %v1243
    %1373 = vst.msk [vmem:[%s3 + $0x14] sm:$0xf] %vm1367, %v1244
    %1374 = vst.msk [vmem:[%s3 + $0x18] sm:$0xf] %vm1367, %v1245
    %1375 = vst.msk [vmem:[%s3 + $0x1c] sm:$0xf] %vm1367, %v1246
    %1376 = vst.msk [vmem:[%s3 + $0x20] sm:$0xf] %vm1367, %v1247
    %1377 = vst.msk [vmem:[%s3 + $0x24] sm:$0xf] %vm1367, %v1248
    %1378 = vst.msk [vmem:[%s3 + $0x28] sm:$0xf] %vm1367, %v1249
    %1379 = vst.msk [vmem:[%s3 + $0x2c] sm:$0xf] %vm1367, %v1250
    %1380 = vst.msk [vmem:[%s3 + $0x30] sm:$0xf] %vm1367, %v1251
    %1381 = vst.msk [vmem:[%s3 + $0x34] sm:$0xf] %vm1367, %v1252
    %1382 = vst.msk [vmem:[%s3 + $0x38] sm:$0xf] %vm1367, %v1253
    %1383 = vst.msk [vmem:[%s3 + $0x3c] sm:$0xf] %vm1367, %v1254
    %1384 = vst.msk [vmem:[%s3 + $0x40] sm:$0xf] %vm1367, %v1255
    %1385 = vst.msk [vmem:[%s3 + $0x44] sm:$0xf] %vm1367, %v1256
    %1386 = vst.msk [vmem:[%s3 + $0x48] sm:$0xf] %vm1367, %v1257
    %1387 = vst.msk [vmem:[%s3 + $0x4c] sm:$0xf] %vm1367, %v1258
    %1388 = vst.msk [vmem:[%s3 + $0x50] sm:$0xf] %vm1367, %v1259
    %1389 = vst.msk [vmem:[%s3 + $0x54] sm:$0xf] %vm1367, %v1260
    %1390 = vst.msk [vmem:[%s3 + $0x58] sm:$0xf] %vm1367, %v1261
    %1391 = vst.msk [vmem:[%s3 + $0x5c] sm:$0xf] %vm1367, %v1262
    %1392 = vst.msk [vmem:[%s3 + $0x60] sm:$0xf] %vm1367, %v1263
    %1393 = vst.msk [vmem:[%s3 + $0x64] sm:$0xf] %vm1367, %v1264
    %1394 = vst.msk [vmem:[%s3 + $0x68] sm:$0xf] %vm1367, %v1265
    %1395 = vst.msk [vmem:[%s3 + $0x6c] sm:$0xf] %vm1367, %v1266
    %1396 = vst.msk [vmem:[%s3 + $0x70] sm:$0xf] %vm1367, %v1267
    %1397 = vst.msk [vmem:[%s3 + $0x74] sm:$0xf] %vm1367, %v1268
    %1398 = vst.msk [vmem:[%s3 + $0x78] sm:$0xf] %vm1367, %v1269
    %1399 = vst.msk [vmem:[%s3 + $0x7c] sm:$0xf] %vm1367, %v1270
    %1400 = vst.msk [vmem:[%s3 + $0x80] sm:$0xf] %vm1367, %v1271
    %1401 = vst.msk [vmem:[%s3 + $0x84] sm:$0xf] %vm1367, %v1272
    %1402 = vst.msk [vmem:[%s3 + $0x88] sm:$0xf] %vm1367, %v1273
    %1403 = vst.msk [vmem:[%s3 + $0x8c] sm:$0xf] %vm1367, %v1274
    %1404 = vst.msk [vmem:[%s3 + $0x90] sm:$0xf] %vm1367, %v1275
    %1405 = vst.msk [vmem:[%s3 + $0x94] sm:$0xf] %vm1367, %v1276
    %1406 = vst.msk [vmem:[%s3 + $0x98] sm:$0xf] %vm1367, %v1277
    %1407 = vst.msk [vmem:[%s3 + $0x9c] sm:$0xf] %vm1367, %v1278
    %1408 = vst.msk [vmem:[%s3 + $0xa0] sm:$0xf] %vm1367, %v1279
    %1409 = vst.msk [vmem:[%s3 + $0xa4] sm:$0xf] %vm1367, %v1280
    %1410 = vst.msk [vmem:[%s3 + $0xa8] sm:$0xf] %vm1367, %v1281
    %1411 = vst.msk [vmem:[%s3 + $0xac] sm:$0xf] %vm1367, %v1282
    %1412 = vst.msk [vmem:[%s3 + $0xb0] sm:$0xf] %vm1367, %v1283
    %1413 = vst.msk [vmem:[%s3 + $0xb4] sm:$0xf] %vm1367, %v1284
    %1414 = vst.msk [vmem:[%s3 + $0xb8] sm:$0xf] %vm1367, %v1285
    %1415 = vst.msk [vmem:[%s3 + $0xbc] sm:$0xf] %vm1367, %v1286
    %1416 = vst.msk [vmem:[%s3 + $0xc0] sm:$0xf] %vm1367, %v1287
    %1417 = vst.msk [vmem:[%s3 + $0xc4] sm:$0xf] %vm1367, %v1288
    %1418 = vst.msk [vmem:[%s3 + $0xc8] sm:$0xf] %vm1367, %v1289
    %1419 = vst.msk [vmem:[%s3 + $0xcc] sm:$0xf] %vm1367, %v1290
    %1420 = vst.msk [vmem:[%s3 + $0xd0] sm:$0xf] %vm1367, %v1291
    %1421 = vst.msk [vmem:[%s3 + $0xd4] sm:$0xf] %vm1367, %v1292
    %1422 = vst.msk [vmem:[%s3 + $0xd8] sm:$0xf] %vm1367, %v1293
    %1423 = vst.msk [vmem:[%s3 + $0xdc] sm:$0xf] %vm1367, %v1294
    %1424 = vst.msk [vmem:[%s3 + $0xe0] sm:$0xf] %vm1367, %v1295
    %1425 = vst.msk [vmem:[%s3 + $0xe4] sm:$0xf] %vm1367, %v1296
    %1426 = vst.msk [vmem:[%s3 + $0xe8] sm:$0xf] %vm1367, %v1297
    %1427 = vst.msk [vmem:[%s3 + $0xec] sm:$0xf] %vm1367, %v1298
    %1428 = vst.msk [vmem:[%s3 + $0xf0] sm:$0xf] %vm1367, %v1299
    %1429 = vst.msk [vmem:[%s3 + $0xf4] sm:$0xf] %vm1367, %v1300
    %1430 = vst.msk [vmem:[%s3 + $0xf8] sm:$0xf] %vm1367, %v1301
    %1431 = vst.msk [vmem:[%s3 + $0xfc] sm:$0xf] %vm1367, %v1302
  $region21: #{tpu_custom_call.1} parent=0 // pred_fallthru
    _
  // Predicated region
  $region22: #{tpu_custom_call.1} parent=0 // pred_check
    _
  $region23: #{tpu_custom_call.1} parent=0 // pred_check_branch
    %1433 = sbr.rel (0) target = $region25
  $region24: #{tpu_custom_call.1} parent=0 // pred_region
    _
  $region25: #{tpu_custom_call.1} parent=0 // pred_fallthru
    _
  // Predicated region
  $region26: #{tpu_custom_call.1} parent=0 // pred_check
    _
  $region27: #{tpu_custom_call.1} parent=0 // pred_check_branch
    %1435 = sbr.rel (0) target = $region29
  $region28: #{tpu_custom_call.1} parent=0 // pred_region
    _
  $region29: #{tpu_custom_call.1} parent=0 // pred_fallthru
    _

</llo_original>
